<compile_context>
chip_gen: v7x
topology: tpu7x:2x2x1
jax: 0.10.0
libtpu: 0.0.40
codegen_flags: <defaults>
</compile_context>

<pallas_src>
import functools

import jax
import jax.numpy as jnp
from jax.experimental import pallas as pl
from jax.experimental.pallas import tpu as pltpu

NV, NJ, NS, NPF = 778, 16, 10, 135   # vertices, joints, shape params, pose-feature dim
VP = 896                              # lane-padded per-coordinate width (7*128)
NVC = 3 * VP                          # 2688: coordinate-major vertex slab width
KF = NS + NPF + 1                     # 146: fused blend contraction (shape|pose|1)

EXTRA_TIPS = jnp.array([745, 317, 444, 556, 673], dtype=jnp.int32)
JOINT_ORDER = jnp.array(
    [0, 13, 14, 15, 16, 1, 2, 3, 17, 4, 5, 6, 18, 10, 11, 12, 19, 7, 8, 9, 20],
    dtype=jnp.int32)
# MANO "nature" kinematic parents (entries 1..15 used, as in the module).
PARENTS = jnp.array([0, 0, 1, 2, 0, 4, 5, 0, 7, 8, 0, 10, 11, 0, 13, 14],
                    dtype=jnp.int32)


# --------------------------------------------------------------------------
# Fused Pallas kernel: blend (shape+pose+template) + LBS skinning
# --------------------------------------------------------------------------
def _mano_fused_kernel(lhs_ref, W_ref, mT_ref, wT_ref, out_ref, v_scr):
    # lhs_ref [TB, 146]    f32 : [shape(10) | pose_feature(135) | 1]
    # W_ref   [146, 2688]  bf16: [shapedirs_cm ; posedirs_cm ; template_cm]
    # mT_ref  [12*TB, 16]  f32 : per-joint 3x4 transform components with the
    #                            global rotation AND translation pre-folded,
    #                            rows grouped (component m=4*i+c, batch).
    # wT_ref  [16, 896]    bf16: LBS weights^T, lane-padded.
    # out_ref [TB, 2688]   f32 : skinned vertices, coordinate-major slab.
    # v_scr   [TB, 2688]   f32 : blended vertices — lives only in VMEM.
    tb = lhs_ref.shape[0]

    # Blend: one MXU dot (bf16 x bf16 -> f32 accumulate) straight into scratch.
    v_scr[...] = jnp.dot(lhs_ref[...].astype(jnp.bfloat16), W_ref[...],
                         preferred_element_type=jnp.float32)

    wT = wT_ref[...]
    vx = v_scr[:, 0 * VP:1 * VP]
    vy = v_scr[:, 1 * VP:2 * VP]
    vz = v_scr[:, 2 * VP:3 * VP]

    # Skin: 3 per-coordinate MXU dots, each consumed immediately (no big spill).
    for i in range(3):
        m = mT_ref[pl.ds(4 * i * tb, 4 * tb), :].astype(jnp.bfloat16)  # [4*TB,16]
        C = jnp.dot(m, wT, preferred_element_type=jnp.float32)          # [4*TB,896]
        out_ref[:, i * VP:(i + 1) * VP] = (
            C[0 * tb:1 * tb] * vx + C[1 * tb:2 * tb] * vy
            + C[2 * tb:3 * tb] * vz + C[3 * tb:4 * tb])


# --------------------------------------------------------------------------
# One-time parameter preprocessing (hoisted out of the per-call hot path)
# --------------------------------------------------------------------------
def prepare_mano_tables(params):
    dtype = jnp.float32
    shapedirs = params['shapedirs'].astype(dtype)      # [778, 3, 10]
    posedirs = params['posedirs'].astype(dtype)        # [135, 2334] (v-major, k-minor)
    tmpl = params['verts_template'].astype(dtype)      # [778, 3]
    Jreg = params['J_regressor'].astype(dtype)         # [16, 778]
    W = params['lbs_weights'].astype(dtype)            # [778, 16]

    # Translation is folded into the per-joint transform translation columns in
    # the glue — exact only because LBS weights sum to 1 (true for MANO).
    assert bool(jnp.allclose(jnp.sum(W, axis=1), 1.0, atol=1e-4)), \
        "LBS weights must sum to 1 for the translation fold."

    def pad_cm(x):  # [R, 3, 778] -> [R, 3*VP], coordinate-major, lane-padded
        x = jnp.pad(x, ((0, 0), (0, 0), (0, VP - NV)))
        return x.reshape(x.shape[0], NVC)

    sd_cm = pad_cm(jnp.transpose(shapedirs, (2, 1, 0)))                     # [10, 2688]
    pd_cm = pad_cm(jnp.transpose(posedirs.reshape(NPF, NV, 3), (0, 2, 1)))  # [135,2688]
    tm_cm = pad_cm(tmpl.T[None])                                            # [1, 2688]
    W_all = jnp.concatenate([sd_cm, pd_cm, tm_cm], axis=0).astype(jnp.bfloat16)

    wT = jnp.pad(W.T, ((0, 0), (0, VP - NV))).astype(jnp.bfloat16)          # [16, 896]

    # Joint regression collapsed onto the tiny shape basis (used in glue):
    #   J = Jreg @ (tmpl + shapedirs·beta)  ==  J_tmpl + beta @ SJ
    J_tmpl = Jreg @ tmpl                                                     # [16, 3]
    SJ = jnp.einsum('jv,vkl->ljk', Jreg, shapedirs).reshape(NS, NJ * 3)      # [10, 48]
    return dict(W_all=W_all, wT=wT, SJ=SJ, J_tmpl=J_tmpl)


# --------------------------------------------------------------------------
# Plain-JAX glue: tiny 16-joint kinematic chain (4x4 composition)
# TODO(synk): the 16-joint 4x4 chain is scalar/tiny and stays in JAX glue.
# --------------------------------------------------------------------------
def _rigid_transforms(J, finger_rmt):
    B = J.shape[0]
    dtype = J.dtype
    I3 = jnp.eye(3, dtype=dtype)
    # apply_global_last=True -> root transform is identity
    transform_rmt = jnp.concatenate(
        [jnp.broadcast_to(I3, (B, 1, 3, 3)), finger_rmt], axis=1)   # [B,16,3,3]
    J_rel = J.at[:, 1:].set(J[:, 1:] - J[:, PARENTS[1:]])
    top = jnp.concatenate([transform_rmt, J_rel[..., None]], axis=-1)   # [B,16,3,4]
    bot = jnp.broadcast_to(jnp.array([0., 0., 0., 1.], dtype=dtype), (B, NJ, 1, 4))
    M = jnp.concatenate([top, bot], axis=-2)                             # [B,16,4,4]
    root_M = M[:, :1]                                                    # [B,1,4,4]
    finger_M = M[:, 1:].reshape(B, 5, 3, 4, 4)
    fM0 = root_M @ finger_M[:, :, 0]
    fM1 = fM0 @ finger_M[:, :, 1]
    fM2 = fM1 @ finger_M[:, :, 2]
    fM = jnp.stack([fM0, fM1, fM2], axis=2).reshape(B, 15, 4, 4)
    M = jnp.concatenate([root_M, fM], axis=1)                            # [B,16,4,4]
    J_transformed = M[:, :, :3, 3]
    corr = jnp.einsum('bjik,bjk->bji', M[:, :, :3, :3], J)
    M = M.at[:, :, :3, 3].add(-corr)
    return M, J_transformed


def _tile_sizes(B):
    # >=2 grid steps whenever B > 8 so dimension_semantics=("parallel",) can
    # shard across both v7x TensorCores; tiles are multiples of 8 (f32 sublane)
    # and capped at 128 (fits all generations' scoped VMEM with margin).
    half = (B + 1) // 2
    tb = min(128, max(8, ((half + 7) // 8) * 8))
    bp = -(-B // tb) * tb
    return bp, tb


# --------------------------------------------------------------------------
# Forward
# --------------------------------------------------------------------------
def mano_forward(global_rmt, finger_rmt, shape, trans, tables):
    dtype = jnp.float32
    B = shape.shape[0]
    global_rmt = global_rmt.astype(dtype)
    finger_rmt = finger_rmt.astype(dtype)
    shape = shape.astype(dtype)
    trans = trans.astype(dtype)
    BP, TB = _tile_sizes(B)

    I3 = jnp.eye(3, dtype=dtype)
    pose_feature = (finger_rmt - I3).reshape(B, NPF)                     # [B, 135]
    lhs = jnp.concatenate([shape, pose_feature, jnp.ones((B, 1), dtype)], axis=1)
    # NOTE: padded rows (>= B) have 0 in the 'ones' column, so their blended
    # vertices are NOT template-offset — harmless because they are sliced off.
    lhs = jnp.pad(lhs, ((0, BP - B), (0, 0)))                            # [BP, 146]

    # ---- tiny joint regression + kinematic chain in glue (feeds the kernel) ----
    J = tables['J_tmpl'][None] + (shape @ tables['SJ']).reshape(B, NJ, 3)
    M, J_transformed = _rigid_transforms(J, finger_rmt)
    G = global_rmt.reshape(B, 3, 3)
    # apply_global_last folded into the per-joint transforms: rows = G @ M[:3,:4]
    MG = jnp.einsum('bik,bjkc->bjic', G, M[:, :, :3, :])                 # [B,16,3,4]
    # fold translation into the translation column (LBS weights sum to 1)
    MG = MG.at[..., 3].add(trans[:, None, :])
    Mcomp = MG.transpose(0, 2, 3, 1).reshape(B, 12, NJ)                  # [B,12,16]
    Mcomp = jnp.pad(Mcomp, ((0, BP - B), (0, 0), (0, 0)))                # [BP,12,16]
    mT2d = (Mcomp.reshape(BP // TB, TB, 12, NJ)
                 .transpose(0, 2, 1, 3)
                 .reshape(12 * BP, NJ))                                  # [12*BP,16]

    # ---- fused blend + skin kernel (single pallas_call) ----
    skinned = pl.pallas_call(
        _mano_fused_kernel,
        out_shape=jax.ShapeDtypeStruct((BP, NVC), dtype),
        grid_spec=pltpu.PrefetchScalarGridSpec(
            num_scalar_prefetch=0,
            grid=(BP // TB,),
            in_specs=[pl.BlockSpec((TB, KF), lambda i: (i, 0)),
                      pl.BlockSpec((KF, NVC), lambda i: (0, 0)),
                      pl.BlockSpec((12 * TB, NJ), lambda i: (i, 0)),
                      pl.BlockSpec((NJ, VP), lambda i: (0, 0))],
            out_specs=pl.BlockSpec((TB, NVC), lambda i: (i, 0)),
            scratch_shapes=[pltpu.VMEM((TB, NVC), jnp.float32)]),
        compiler_params=pltpu.CompilerParams(
            dimension_semantics=("parallel",)),
    )(lhs, tables['W_all'], mT2d, tables['wT'])

    # fingertip gather on the coordinate-major slab (before the de-pad/transpose)
    tip_cols = (jnp.arange(3, dtype=jnp.int32)[:, None] * VP
                + EXTRA_TIPS[None, :]).reshape(-1)                       # [15]
    tips = skinned[:B][:, tip_cols].reshape(B, 3, 5).transpose(0, 2, 1)  # [B,5,3]

    verts = skinned[:B].reshape(B, 3, VP)[:, :, :NV].transpose(0, 2, 1)  # [B,778,3]

    # joints: global rotation + translation, append finger tips, reorder (glue)
    joints = jnp.einsum('bjk,bik->bji', J_transformed, G) + trans[:, None, :]
    joints = jnp.concatenate([joints, tips], axis=1)
    joints = joints[:, JOINT_ORDER, :]
    return verts, joints


# --------------------------------------------------------------------------
# Pure-JAX reference (mirrors the PyTorch module) for validation
# --------------------------------------------------------------------------
def mano_reference(global_rmt, finger_rmt, shape, trans, params):
    dtype = jnp.float32
    B = shape.shape[0]
    I3 = jnp.eye(3, dtype=dtype)
    V = params['verts_template'][None] + jnp.einsum('bl,vkl->bvk', shape,
                                                    params['shapedirs'])
    J = jnp.einsum('bvk,jv->bjk', V, params['J_regressor'])
    pose_feature = (finger_rmt - I3).reshape(B, -1)
    V = V + (pose_feature @ params['posedirs']).reshape(B, -1, 3)
    M, J_transformed = _rigid_transforms(J, finger_rmt)
    W = params['lbs_weights']
    Mv = jnp.einsum('vj,bjc->bvc', W, M.reshape(B, NJ, 16)).reshape(B, NV, 4, 4)
    Vt = jnp.einsum('bvik,bvk->bvi', Mv[..., :3, :3], V) + Mv[..., :3, 3]
    G = global_rmt.reshape(B, 3, 3)
    Jt = jnp.einsum('bjk,bik->bji', J_transformed, G)
    Vt = jnp.einsum('bvk,bik->bvi', Vt, G)
    verts = Vt + trans[:, None, :]
    joints = Jt + trans[:, None, :]
    joints = jnp.concatenate([joints, verts[:, EXTRA_TIPS, :]], axis=1)
    joints = joints[:, JOINT_ORDER, :]
    return verts, joints


# --------------------------------------------------------------------------
# Deterministic synthetic MANO buffers (shapes from the module's __init__)
# --------------------------------------------------------------------------
def make_mano_params(key):
    ks = jax.random.split(key, 5)
    return dict(
        verts_template=jax.random.uniform(ks[0], (NV, 3), jnp.float32, -0.1, 0.1),
        shapedirs=jax.random.normal(ks[1], (NV, 3, NS), jnp.float32) * 0.01,
        posedirs=jax.random.normal(ks[2], (NPF, NV * 3), jnp.float32) * 0.001,
        J_regressor=jax.nn.softmax(
            jax.random.normal(ks[3], (NJ, NV), jnp.float32), axis=-1),
        lbs_weights=jax.nn.softmax(
            jax.random.normal(ks[4], (NV, NJ), jnp.float32) * 2.0, axis=-1),
    )


def rodrigues(rv):
    angle = jnp.linalg.norm(rv + 1e-8, axis=-1, keepdims=True)
    axis = rv / (angle + 1e-8)
    x, y, z = axis[..., 0], axis[..., 1], axis[..., 2]
    zeros = jnp.zeros_like(x)
    K = jnp.stack([zeros, -z, y, z, zeros, -x, -y, x, zeros],
                  axis=-1).reshape(rv.shape[:-1] + (3, 3))
    s = jnp.sin(angle)[..., None]
    c = jnp.cos(angle)[..., None]
    return jnp.eye(3, dtype=rv.dtype) + s * K + (1.0 - c) * (K @ K)


if __name__ == "__main__":
    B = 2
    key = jax.random.PRNGKey(0)
    kg, kf, ks, kt = jax.random.split(key, 4)
    global_rmt = rodrigues(jax.random.normal(kg, (B, 1, 3), jnp.float32) * 0.5)
    finger_rmt = rodrigues(jax.random.normal(kf, (B, 15, 3), jnp.float32) * 0.3)
    shape = jax.random.normal(ks, (B, NS), jnp.float32) * 0.5
    trans = jax.random.normal(kt, (B, 3), jnp.float32) * 0.1

    params = make_mano_params(jax.random.PRNGKey(1))
    tables = prepare_mano_tables(params)   # one-time table build, outside the jit

    fwd = jax.jit(functools.partial(mano_forward, tables=tables))
    verts, joints = fwd(global_rmt, finger_rmt, shape, trans)
    jax.block_until_ready((verts, joints))

    assert verts.shape == (B, NV, 3), verts.shape
    assert joints.shape == (B, 21, 3), joints.shape

    v_ref, j_ref = mano_reference(global_rmt, finger_rmt, shape, trans, params)
    assert bool(jnp.all(jnp.isfinite(verts))) and bool(jnp.all(jnp.isfinite(joints)))
    assert bool(jnp.allclose(verts, v_ref, atol=1e-2, rtol=1e-2)), "verts mismatch"
    assert bool(jnp.allclose(joints, j_ref, atol=1e-2, rtol=1e-2)), "joints mismatch"

    print("KERNEL_OK")
</pallas_src>

<mosaic_0001>
module attributes {stable_mosaic.version = 11 : i64} {
  func.func @_mano_fused_kernel(%arg0: i32, %arg1: memref<8x146xf32, #tpu.memory_space<vmem>>, %arg2: memref<146x2688xbf16, #tpu.memory_space<vmem>>, %arg3: memref<96x16xf32, #tpu.memory_space<vmem>>, %arg4: memref<16x896xbf16, #tpu.memory_space<vmem>>, %arg5: memref<8x2688xf32, #tpu.memory_space<vmem>>, %arg6: memref<8x2688xf32, #tpu.memory_space<vmem>>) attributes {dimension_semantics = [#tpu.dimension_semantics<parallel>], iteration_bounds = array<i64: 1>, scalar_prefetch = 0 : i64, scratch_operands = 1 : i64, tpu.core_type = #tpu.core_type<tc>, window_params = [{transform_indices = @transform_0, window_bounds = array<i64: 8, 146>}, {pipeline_mode = #tpu.pipeline_mode<synchronous>, transform_indices = @transform_1, window_bounds = array<i64: 146, 2688>}, {transform_indices = @transform_2, window_bounds = array<i64: 96, 16>}, {pipeline_mode = #tpu.pipeline_mode<synchronous>, transform_indices = @transform_3, window_bounds = array<i64: 16, 896>}, {transform_indices = @transform_4, window_bounds = array<i64: 8, 2688>}]} {
    %c0 = arith.constant 0 : index
    %c0_0 = arith.constant 0 : index
    %0 = vector.load %arg1[%c0, %c0_0] : memref<8x146xf32, #tpu.memory_space<vmem>>, vector<8x146xf32>
    %1 = arith.truncf %0 : vector<8x146xf32> to vector<8x146xbf16>
    %c0_1 = arith.constant 0 : index
    %c0_2 = arith.constant 0 : index
    %2 = vector.load %arg2[%c0_1, %c0_2] : memref<146x2688xbf16, #tpu.memory_space<vmem>>, vector<146x2688xbf16>
    %cst = arith.constant dense<0.000000e+00> : vector<8x2688xf32>
    %3 = tpu.matmul %1, %2, %cst {dimension_numbers = #tpu.dot_dimension_numbers<[1], [0], [0], [1], [0, 0, 1, 1], [], []>} : vector<8x146xbf16>, vector<146x2688xbf16>, vector<8x2688xf32> -> vector<8x2688xf32>
    %c0_3 = arith.constant 0 : index
    %c0_4 = arith.constant 0 : index
    %4 = vector.load %arg6[%c0_3, %c0_4] : memref<8x2688xf32, #tpu.memory_space<vmem>>, vector<8x2688xf32>
    tpu.vector_store %arg6[%c0_3, %c0_4], %3 {strides = array<i32>} : memref<8x2688xf32, #tpu.memory_space<vmem>>, vector<8x2688xf32>,
    %c0_5 = arith.constant 0 : index
    %c0_6 = arith.constant 0 : index
    %5 = vector.load %arg4[%c0_5, %c0_6] : memref<16x896xbf16, #tpu.memory_space<vmem>>, vector<16x896xbf16>
    %c0_7 = arith.constant 0 : index
    %c0_8 = arith.constant 0 : index
    %6 = vector.load %arg6[%c0_7, %c0_8] : memref<8x2688xf32, #tpu.memory_space<vmem>>, vector<8x896xf32>
    %c0_9 = arith.constant 0 : index
    %c896 = arith.constant 896 : index
    %7 = vector.load %arg6[%c0_9, %c896] : memref<8x2688xf32, #tpu.memory_space<vmem>>, vector<8x896xf32>
    %c0_10 = arith.constant 0 : index
    %c1792 = arith.constant 1792 : index
    %8 = vector.load %arg6[%c0_10, %c1792] : memref<8x2688xf32, #tpu.memory_space<vmem>>, vector<8x896xf32>
    %c0_11 = arith.constant 0 : index
    %c0_12 = arith.constant 0 : index
    %9 = vector.load %arg3[%c0_11, %c0_12] : memref<96x16xf32, #tpu.memory_space<vmem>>, vector<32x16xf32>
    %10 = arith.truncf %9 : vector<32x16xf32> to vector<32x16xbf16>
    %cst_13 = arith.constant dense<0.000000e+00> : vector<32x896xf32>
    %11 = tpu.matmul %10, %5, %cst_13 {dimension_numbers = #tpu.dot_dimension_numbers<[1], [0], [0], [1], [0, 0, 1, 1], [], []>} : vector<32x16xbf16>, vector<16x896xbf16>, vector<32x896xf32> -> vector<32x896xf32>
    %12 = vector.extract_strided_slice %11 {offsets = [0, 0], sizes = [8, 896], strides = [1, 1]} : vector<32x896xf32> to vector<8x896xf32>
    %13 = arith.mulf %12, %6 : vector<8x896xf32>
    %14 = vector.extract_strided_slice %11 {offsets = [8, 0], sizes = [8, 896], strides = [1, 1]} : vector<32x896xf32> to vector<8x896xf32>
    %15 = arith.mulf %14, %7 : vector<8x896xf32>
    %16 = arith.addf %13, %15 : vector<8x896xf32>
    %17 = vector.extract_strided_slice %11 {offsets = [16, 0], sizes = [8, 896], strides = [1, 1]} : vector<32x896xf32> to vector<8x896xf32>
    %18 = arith.mulf %17, %8 : vector<8x896xf32>
    %19 = arith.addf %16, %18 : vector<8x896xf32>
    %20 = vector.extract_strided_slice %11 {offsets = [24, 0], sizes = [8, 896], strides = [1, 1]} : vector<32x896xf32> to vector<8x896xf32>
    %21 = arith.addf %19, %20 : vector<8x896xf32>
    %c0_14 = arith.constant 0 : index
    %c0_15 = arith.constant 0 : index
    %22 = vector.load %arg5[%c0_14, %c0_15] : memref<8x2688xf32, #tpu.memory_space<vmem>>, vector<8x896xf32>
    tpu.vector_store %arg5[%c0_14, %c0_15], %21 {strides = array<i32>} : memref<8x2688xf32, #tpu.memory_space<vmem>>, vector<8x896xf32>,
    %c32 = arith.constant 32 : index
    %c0_16 = arith.constant 0 : index
    %23 = vector.load %arg3[%c32, %c0_16] : memref<96x16xf32, #tpu.memory_space<vmem>>, vector<32x16xf32>
    %24 = arith.truncf %23 : vector<32x16xf32> to vector<32x16xbf16>
    %cst_17 = arith.constant dense<0.000000e+00> : vector<32x896xf32>
    %25 = tpu.matmul %24, %5, %cst_17 {dimension_numbers = #tpu.dot_dimension_numbers<[1], [0], [0], [1], [0, 0, 1, 1], [], []>} : vector<32x16xbf16>, vector<16x896xbf16>, vector<32x896xf32> -> vector<32x896xf32>
    %26 = vector.extract_strided_slice %25 {offsets = [0, 0], sizes = [8, 896], strides = [1, 1]} : vector<32x896xf32> to vector<8x896xf32>
    %27 = arith.mulf %26, %6 : vector<8x896xf32>
    %28 = vector.extract_strided_slice %25 {offsets = [8, 0], sizes = [8, 896], strides = [1, 1]} : vector<32x896xf32> to vector<8x896xf32>
    %29 = arith.mulf %28, %7 : vector<8x896xf32>
    %30 = arith.addf %27, %29 : vector<8x896xf32>
    %31 = vector.extract_strided_slice %25 {offsets = [16, 0], sizes = [8, 896], strides = [1, 1]} : vector<32x896xf32> to vector<8x896xf32>
    %32 = arith.mulf %31, %8 : vector<8x896xf32>
    %33 = arith.addf %30, %32 : vector<8x896xf32>
    %34 = vector.extract_strided_slice %25 {offsets = [24, 0], sizes = [8, 896], strides = [1, 1]} : vector<32x896xf32> to vector<8x896xf32>
    %35 = arith.addf %33, %34 : vector<8x896xf32>
    %c0_18 = arith.constant 0 : index
    %c896_19 = arith.constant 896 : index
    %36 = vector.load %arg5[%c0_18, %c896_19] : memref<8x2688xf32, #tpu.memory_space<vmem>>, vector<8x896xf32>
    tpu.vector_store %arg5[%c0_18, %c896_19], %35 {strides = array<i32>} : memref<8x2688xf32, #tpu.memory_space<vmem>>, vector<8x896xf32>,
    %c64 = arith.constant 64 : index
    %c0_20 = arith.constant 0 : index
    %37 = vector.load %arg3[%c64, %c0_20] : memref<96x16xf32, #tpu.memory_space<vmem>>, vector<32x16xf32>
    %38 = arith.truncf %37 : vector<32x16xf32> to vector<32x16xbf16>
    %cst_21 = arith.constant dense<0.000000e+00> : vector<32x896xf32>
    %39 = tpu.matmul %38, %5, %cst_21 {dimension_numbers = #tpu.dot_dimension_numbers<[1], [0], [0], [1], [0, 0, 1, 1], [], []>} : vector<32x16xbf16>, vector<16x896xbf16>, vector<32x896xf32> -> vector<32x896xf32>
    %40 = vector.extract_strided_slice %39 {offsets = [0, 0], sizes = [8, 896], strides = [1, 1]} : vector<32x896xf32> to vector<8x896xf32>
    %41 = arith.mulf %40, %6 : vector<8x896xf32>
    %42 = vector.extract_strided_slice %39 {offsets = [8, 0], sizes = [8, 896], strides = [1, 1]} : vector<32x896xf32> to vector<8x896xf32>
    %43 = arith.mulf %42, %7 : vector<8x896xf32>
    %44 = arith.addf %41, %43 : vector<8x896xf32>
    %45 = vector.extract_strided_slice %39 {offsets = [16, 0], sizes = [8, 896], strides = [1, 1]} : vector<32x896xf32> to vector<8x896xf32>
    %46 = arith.mulf %45, %8 : vector<8x896xf32>
    %47 = arith.addf %44, %46 : vector<8x896xf32>
    %48 = vector.extract_strided_slice %39 {offsets = [24, 0], sizes = [8, 896], strides = [1, 1]} : vector<32x896xf32> to vector<8x896xf32>
    %49 = arith.addf %47, %48 : vector<8x896xf32>
    %c0_22 = arith.constant 0 : index
    %c1792_23 = arith.constant 1792 : index
    %50 = vector.load %arg5[%c0_22, %c1792_23] : memref<8x2688xf32, #tpu.memory_space<vmem>>, vector<8x896xf32>
    tpu.vector_store %arg5[%c0_22, %c1792_23], %49 {strides = array<i32>} : memref<8x2688xf32, #tpu.memory_space<vmem>>, vector<8x896xf32>,
    return
  }
  func.func @transform_0(%arg0: i32) -> (i32, i32) {
    %c0_i32 = arith.constant 0 : i32
    %c0_i32_0 = arith.constant 0 : i32
    return %arg0, %c0_i32 : i32, i32
  }
  func.func @transform_1(%arg0: i32) -> (i32, i32) {
    %c0_i32 = arith.constant 0 : i32
    %c0_i32_0 = arith.constant 0 : i32
    %c0_i32_1 = arith.constant 0 : i32
    return %c0_i32, %c0_i32_0 : i32, i32
  }
  func.func @transform_2(%arg0: i32) -> (i32, i32) {
    %c0_i32 = arith.constant 0 : i32
    %c0_i32_0 = arith.constant 0 : i32
    return %arg0, %c0_i32 : i32, i32
  }
  func.func @transform_3(%arg0: i32) -> (i32, i32) {
    %c0_i32 = arith.constant 0 : i32
    %c0_i32_0 = arith.constant 0 : i32
    %c0_i32_1 = arith.constant 0 : i32
    return %c0_i32, %c0_i32_0 : i32, i32
  }
  func.func @transform_4(%arg0: i32) -> (i32, i32) {
    %c0_i32 = arith.constant 0 : i32
    %c0_i32_0 = arith.constant 0 : i32
    return %arg0, %c0_i32 : i32, i32
  }
}

</mosaic_0001>

<llo_original>
// kernel: mano_forward.1
$region0: #{mano_forward.1}
  #allocation0 [shape = 'u32[]', space=smem, size = 0x4, offset = 0x4, fixed_abs, tag = 'smem constant byte address 0x4 - core index']
  #allocation1 [shape = 'u32[144,128]{1,0:T(1,128)}', space=vmem, size = 0x12000, scoped, tag = 'internal scratch']
  #allocation2 [shape = 'f32[8,2688]{1,0:T(8,128)}', space=vmem, size = 0x15000, scoped, tag = 'scratch operand']
  %s0 = inlined_call_operand.vmem [shape: f32[8,146], index: 0, kind: input, shape index: {}]
  %s1 = inlined_call_operand.vmem [shape: bf16[146,2688], index: 1, kind: input, shape index: {}]
  %s2 = inlined_call_operand.vmem [shape: f32[96,16], index: 2, kind: input, shape index: {}]
  %s3 = inlined_call_operand.vmem [shape: bf16[16,896], index: 3, kind: input, shape index: {}]
  %s4 = inlined_call_operand.vmem [shape: f32[8,2688], index: 4, kind: output, shape index: {}]
  %s5 = sld [smem:[#allocation0]]
  $region26: #{mano_forward.1} parent=0
    _
  %s7 = ssub.s32 1, %s5
  %s8 = scalar_select 0, %s7, %s5
  // Predicated region
  $region2: #{mano_forward.1} parent=0 // pred_check
    _
  $region3: #{mano_forward.1} parent=0 // pred_check_branch
    %10 = sbr.rel (0) target = $region5
  $region4: #{mano_forward.1} parent=0 // pred_region
    _
  $region5: #{mano_forward.1} parent=0 // pred_fallthru
    _
  // Predicated region
  $region6: #{mano_forward.1} parent=0 // pred_check
    _
  $region7: #{mano_forward.1} parent=0 // pred_check_branch
    %12 = sbr.rel (0) target = $region9
  $region8: #{mano_forward.1} parent=0 // pred_region
    _
  $region9: #{mano_forward.1} parent=0 // pred_fallthru
    _
  // Predicated region
  $region10: #{mano_forward.1} parent=0 // pred_check
    _
  $region11: #{mano_forward.1} parent=0 // pred_check_branch
    %14 = sbr.rel (0) target = $region13
  $region12: #{mano_forward.1} parent=0 // pred_region
    _
  $region13: #{mano_forward.1} parent=0 // pred_fallthru
    _
  // Predicated region
  $region14: #{mano_forward.1} parent=0 // pred_check
    _
  $region15: #{mano_forward.1} parent=0 // pred_check_branch
    %16 = sbr.rel (0) target = $region17
  $region16: #{mano_forward.1} parent=0 // pred_region
    _
  $region17: #{mano_forward.1} parent=0 // pred_fallthru
    _
  %v18 = vld [vmem:[%s0] sm:$0xff]
  %v19 = vld [vmem:[%s0 + $0x8] sm:$0xff]
  %v20 = vpack.c.bf16 %v18, %v18
  %v21 = vpack.c.bf16 %v19, %v19
  %v22 = vld [vmem:[%s1] sm:$0xff]
  %v23 = vld [vmem:[%s1 + $0x8] sm:$0xff]
  %v24 = vld [vmem:[%s1 + $0x10] sm:$0xff]
  %v25 = vld [vmem:[%s1 + $0x18] sm:$0xff]
  %v26 = vld [vmem:[%s1 + $0x20] sm:$0xff]
  %v27 = vld [vmem:[%s1 + $0x28] sm:$0xff]
  %v28 = vld [vmem:[%s1 + $0x30] sm:$0xff]
  %v29 = vld [vmem:[%s1 + $0x38] sm:$0xff]
  %v30 = vld [vmem:[%s1 + $0x40] sm:$0xff]
  %v31 = vld [vmem:[%s1 + $0x48] sm:$0xff]
  %v32 = vld [vmem:[%s1 + $0x50] sm:$0xf]
  %v33 = vld [vmem:[%s1 + $0x54] sm:$0xff]
  %v34 = vld [vmem:[%s1 + $0x5c] sm:$0xff]
  %v35 = vld [vmem:[%s1 + $0x64] sm:$0xff]
  %v36 = vld [vmem:[%s1 + $0x6c] sm:$0xff]
  %v37 = vld [vmem:[%s1 + $0x74] sm:$0xff]
  %v38 = vld [vmem:[%s1 + $0x7c] sm:$0xff]
  %v39 = vld [vmem:[%s1 + $0x84] sm:$0xff]
  %v40 = vld [vmem:[%s1 + $0x8c] sm:$0xff]
  %v41 = vld [vmem:[%s1 + $0x94] sm:$0xff]
  %v42 = vld [vmem:[%s1 + $0x9c] sm:$0xff]
  %v43 = vld [vmem:[%s1 + $0xa4] sm:$0xf]
  %v44 = vld [vmem:[%s1 + $0xa8] sm:$0xff]
  %v45 = vld [vmem:[%s1 + $0xb0] sm:$0xff]
  %v46 = vld [vmem:[%s1 + $0xb8] sm:$0xff]
  %v47 = vld [vmem:[%s1 + $0xc0] sm:$0xff]
  %v48 = vld [vmem:[%s1 + $0xc8] sm:$0xff]
  %v49 = vld [vmem:[%s1 + $0xd0] sm:$0xff]
  %v50 = vld [vmem:[%s1 + $0xd8] sm:$0xff]
  %v51 = vld [vmem:[%s1 + $0xe0] sm:$0xff]
  %v52 = vld [vmem:[%s1 + $0xe8] sm:$0xff]
  %v53 = vld [vmem:[%s1 + $0xf0] sm:$0xff]
  %v54 = vld [vmem:[%s1 + $0xf8] sm:$0xf]
  %v55 = vld [vmem:[%s1 + $0xfc] sm:$0xff]
  %v56 = vld [vmem:[%s1 + $0x104] sm:$0xff]
  %v57 = vld [vmem:[%s1 + $0x10c] sm:$0xff]
  %v58 = vld [vmem:[%s1 + $0x114] sm:$0xff]
  %v59 = vld [vmem:[%s1 + $0x11c] sm:$0xff]
  %v60 = vld [vmem:[%s1 + $0x124] sm:$0xff]
  %v61 = vld [vmem:[%s1 + $0x12c] sm:$0xff]
  %v62 = vld [vmem:[%s1 + $0x134] sm:$0xff]
  %v63 = vld [vmem:[%s1 + $0x13c] sm:$0xff]
  %v64 = vld [vmem:[%s1 + $0x144] sm:$0xff]
  %v65 = vld [vmem:[%s1 + $0x14c] sm:$0xf]
  %v66 = vld [vmem:[%s1 + $0x150] sm:$0xff]
  %v67 = vld [vmem:[%s1 + $0x158] sm:$0xff]
  %v68 = vld [vmem:[%s1 + $0x160] sm:$0xff]
  %v69 = vld [vmem:[%s1 + $0x168] sm:$0xff]
  %v70 = vld [vmem:[%s1 + $0x170] sm:$0xff]
  %v71 = vld [vmem:[%s1 + $0x178] sm:$0xff]
  %v72 = vld [vmem:[%s1 + $0x180] sm:$0xff]
  %v73 = vld [vmem:[%s1 + $0x188] sm:$0xff]
  %v74 = vld [vmem:[%s1 + $0x190] sm:$0xff]
  %v75 = vld [vmem:[%s1 + $0x198] sm:$0xff]
  %v76 = vld [vmem:[%s1 + $0x1a0] sm:$0xf]
  %v77 = vld [vmem:[%s1 + $0x1a4] sm:$0xff]
  %v78 = vld [vmem:[%s1 + $0x1ac] sm:$0xff]
  %v79 = vld [vmem:[%s1 + $0x1b4] sm:$0xff]
  %v80 = vld [vmem:[%s1 + $0x1bc] sm:$0xff]
  %v81 = vld [vmem:[%s1 + $0x1c4] sm:$0xff]
  %v82 = vld [vmem:[%s1 + $0x1cc] sm:$0xff]
  %v83 = vld [vmem:[%s1 + $0x1d4] sm:$0xff]
  %v84 = vld [vmem:[%s1 + $0x1dc] sm:$0xff]
  %v85 = vld [vmem:[%s1 + $0x1e4] sm:$0xff]
  %v86 = vld [vmem:[%s1 + $0x1ec] sm:$0xff]
  %v87 = vld [vmem:[%s1 + $0x1f4] sm:$0xf]
  %v88 = vld [vmem:[%s1 + $0x1f8] sm:$0xff]
  %v89 = vld [vmem:[%s1 + $0x200] sm:$0xff]
  %v90 = vld [vmem:[%s1 + $0x208] sm:$0xff]
  %v91 = vld [vmem:[%s1 + $0x210] sm:$0xff]
  %v92 = vld [vmem:[%s1 + $0x218] sm:$0xff]
  %v93 = vld [vmem:[%s1 + $0x220] sm:$0xff]
  %v94 = vld [vmem:[%s1 + $0x228] sm:$0xff]
  %v95 = vld [vmem:[%s1 + $0x230] sm:$0xff]
  %v96 = vld [vmem:[%s1 + $0x238] sm:$0xff]
  %v97 = vld [vmem:[%s1 + $0x240] sm:$0xff]
  %v98 = vld [vmem:[%s1 + $0x248] sm:$0xf]
  %v99 = vld [vmem:[%s1 + $0x24c] sm:$0xff]
  %v100 = vld [vmem:[%s1 + $0x254] sm:$0xff]
  %v101 = vld [vmem:[%s1 + $0x25c] sm:$0xff]
  %v102 = vld [vmem:[%s1 + $0x264] sm:$0xff]
  %v103 = vld [vmem:[%s1 + $0x26c] sm:$0xff]
  %v104 = vld [vmem:[%s1 + $0x274] sm:$0xff]
  %v105 = vld [vmem:[%s1 + $0x27c] sm:$0xff]
  %v106 = vld [vmem:[%s1 + $0x284] sm:$0xff]
  %v107 = vld [vmem:[%s1 + $0x28c] sm:$0xff]
  %v108 = vld [vmem:[%s1 + $0x294] sm:$0xff]
  %v109 = vld [vmem:[%s1 + $0x29c] sm:$0xf]
  %v110 = vld [vmem:[%s1 + $0x2a0] sm:$0xff]
  %v111 = vld [vmem:[%s1 + $0x2a8] sm:$0xff]
  %v112 = vld [vmem:[%s1 + $0x2b0] sm:$0xff]
  %v113 = vld [vmem:[%s1 + $0x2b8] sm:$0xff]
  %v114 = vld [vmem:[%s1 + $0x2c0] sm:$0xff]
  %v115 = vld [vmem:[%s1 + $0x2c8] sm:$0xff]
  %v116 = vld [vmem:[%s1 + $0x2d0] sm:$0xff]
  %v117 = vld [vmem:[%s1 + $0x2d8] sm:$0xff]
  %v118 = vld [vmem:[%s1 + $0x2e0] sm:$0xff]
  %v119 = vld [vmem:[%s1 + $0x2e8] sm:$0xff]
  %v120 = vld [vmem:[%s1 + $0x2f0] sm:$0xf]
  %v121 = vld [vmem:[%s1 + $0x2f4] sm:$0xff]
  %v122 = vld [vmem:[%s1 + $0x2fc] sm:$0xff]
  %v123 = vld [vmem:[%s1 + $0x304] sm:$0xff]
  %v124 = vld [vmem:[%s1 + $0x30c] sm:$0xff]
  %v125 = vld [vmem:[%s1 + $0x314] sm:$0xff]
  %v126 = vld [vmem:[%s1 + $0x31c] sm:$0xff]
  %v127 = vld [vmem:[%s1 + $0x324] sm:$0xff]
  %v128 = vld [vmem:[%s1 + $0x32c] sm:$0xff]
  %v129 = vld [vmem:[%s1 + $0x334] sm:$0xff]
  %v130 = vld [vmem:[%s1 + $0x33c] sm:$0xff]
  %v131 = vld [vmem:[%s1 + $0x344] sm:$0xf]
  %v132 = vld [vmem:[%s1 + $0x348] sm:$0xff]
  %v133 = vld [vmem:[%s1 + $0x350] sm:$0xff]
  %v134 = vld [vmem:[%s1 + $0x358] sm:$0xff]
  %v135 = vld [vmem:[%s1 + $0x360] sm:$0xff]
  %v136 = vld [vmem:[%s1 + $0x368] sm:$0xff]
  %v137 = vld [vmem:[%s1 + $0x370] sm:$0xff]
  %v138 = vld [vmem:[%s1 + $0x378] sm:$0xff]
  %v139 = vld [vmem:[%s1 + $0x380] sm:$0xff]
  %v140 = vld [vmem:[%s1 + $0x388] sm:$0xff]
  %v141 = vld [vmem:[%s1 + $0x390] sm:$0xff]
  %v142 = vld [vmem:[%s1 + $0x398] sm:$0xf]
  %v143 = vld [vmem:[%s1 + $0x39c] sm:$0xff]
  %v144 = vld [vmem:[%s1 + $0x3a4] sm:$0xff]
  %v145 = vld [vmem:[%s1 + $0x3ac] sm:$0xff]
  %v146 = vld [vmem:[%s1 + $0x3b4] sm:$0xff]
  %v147 = vld [vmem:[%s1 + $0x3bc] sm:$0xff]
  %v148 = vld [vmem:[%s1 + $0x3c4] sm:$0xff]
  %v149 = vld [vmem:[%s1 + $0x3cc] sm:$0xff]
  %v150 = vld [vmem:[%s1 + $0x3d4] sm:$0xff]
  %v151 = vld [vmem:[%s1 + $0x3dc] sm:$0xff]
  %v152 = vld [vmem:[%s1 + $0x3e4] sm:$0xff]
  %v153 = vld [vmem:[%s1 + $0x3ec] sm:$0xf]
  %v154 = vld [vmem:[%s1 + $0x3f0] sm:$0xff]
  %v155 = vld [vmem:[%s1 + $0x3f8] sm:$0xff]
  %v156 = vld [vmem:[%s1 + $0x400] sm:$0xff]
  %v157 = vld [vmem:[%s1 + $0x408] sm:$0xff]
  %v158 = vld [vmem:[%s1 + $0x410] sm:$0xff]
  %v159 = vld [vmem:[%s1 + $0x418] sm:$0xff]
  %v160 = vld [vmem:[%s1 + $0x420] sm:$0xff]
  %v161 = vld [vmem:[%s1 + $0x428] sm:$0xff]
  %v162 = vld [vmem:[%s1 + $0x430] sm:$0xff]
  %v163 = vld [vmem:[%s1 + $0x438] sm:$0xff]
  %v164 = vld [vmem:[%s1 + $0x440] sm:$0xf]
  %v165 = vld [vmem:[%s1 + $0x444] sm:$0xff]
  %v166 = vld [vmem:[%s1 + $0x44c] sm:$0xff]
  %v167 = vld [vmem:[%s1 + $0x454] sm:$0xff]
  %v168 = vld [vmem:[%s1 + $0x45c] sm:$0xff]
  %v169 = vld [vmem:[%s1 + $0x464] sm:$0xff]
  %v170 = vld [vmem:[%s1 + $0x46c] sm:$0xff]
  %v171 = vld [vmem:[%s1 + $0x474] sm:$0xff]
  %v172 = vld [vmem:[%s1 + $0x47c] sm:$0xff]
  %v173 = vld [vmem:[%s1 + $0x484] sm:$0xff]
  %v174 = vld [vmem:[%s1 + $0x48c] sm:$0xff]
  %v175 = vld [vmem:[%s1 + $0x494] sm:$0xf]
  %v176 = vld [vmem:[%s1 + $0x498] sm:$0xff]
  %v177 = vld [vmem:[%s1 + $0x4a0] sm:$0xff]
  %v178 = vld [vmem:[%s1 + $0x4a8] sm:$0xff]
  %v179 = vld [vmem:[%s1 + $0x4b0] sm:$0xff]
  %v180 = vld [vmem:[%s1 + $0x4b8] sm:$0xff]
  %v181 = vld [vmem:[%s1 + $0x4c0] sm:$0xff]
  %v182 = vld [vmem:[%s1 + $0x4c8] sm:$0xff]
  %v183 = vld [vmem:[%s1 + $0x4d0] sm:$0xff]
  %v184 = vld [vmem:[%s1 + $0x4d8] sm:$0xff]
  %v185 = vld [vmem:[%s1 + $0x4e0] sm:$0xff]
  %v186 = vld [vmem:[%s1 + $0x4e8] sm:$0xf]
  %v187 = vld [vmem:[%s1 + $0x4ec] sm:$0xff]
  %v188 = vld [vmem:[%s1 + $0x4f4] sm:$0xff]
  %v189 = vld [vmem:[%s1 + $0x4fc] sm:$0xff]
  %v190 = vld [vmem:[%s1 + $0x504] sm:$0xff]
  %v191 = vld [vmem:[%s1 + $0x50c] sm:$0xff]
  %v192 = vld [vmem:[%s1 + $0x514] sm:$0xff]
  %v193 = vld [vmem:[%s1 + $0x51c] sm:$0xff]
  %v194 = vld [vmem:[%s1 + $0x524] sm:$0xff]
  %v195 = vld [vmem:[%s1 + $0x52c] sm:$0xff]
  %v196 = vld [vmem:[%s1 + $0x534] sm:$0xff]
  %v197 = vld [vmem:[%s1 + $0x53c] sm:$0xf]
  %v198 = vld [vmem:[%s1 + $0x540] sm:$0xff]
  %v199 = vld [vmem:[%s1 + $0x548] sm:$0xff]
  %v200 = vld [vmem:[%s1 + $0x550] sm:$0xff]
  %v201 = vld [vmem:[%s1 + $0x558] sm:$0xff]
  %v202 = vld [vmem:[%s1 + $0x560] sm:$0xff]
  %v203 = vld [vmem:[%s1 + $0x568] sm:$0xff]
  %v204 = vld [vmem:[%s1 + $0x570] sm:$0xff]
  %v205 = vld [vmem:[%s1 + $0x578] sm:$0xff]
  %v206 = vld [vmem:[%s1 + $0x580] sm:$0xff]
  %v207 = vld [vmem:[%s1 + $0x588] sm:$0xff]
  %v208 = vld [vmem:[%s1 + $0x590] sm:$0xf]
  %v209 = vld [vmem:[%s1 + $0x594] sm:$0xff]
  %v210 = vld [vmem:[%s1 + $0x59c] sm:$0xff]
  %v211 = vld [vmem:[%s1 + $0x5a4] sm:$0xff]
  %v212 = vld [vmem:[%s1 + $0x5ac] sm:$0xff]
  %v213 = vld [vmem:[%s1 + $0x5b4] sm:$0xff]
  %v214 = vld [vmem:[%s1 + $0x5bc] sm:$0xff]
  %v215 = vld [vmem:[%s1 + $0x5c4] sm:$0xff]
  %v216 = vld [vmem:[%s1 + $0x5cc] sm:$0xff]
  %v217 = vld [vmem:[%s1 + $0x5d4] sm:$0xff]
  %v218 = vld [vmem:[%s1 + $0x5dc] sm:$0xff]
  %v219 = vld [vmem:[%s1 + $0x5e4] sm:$0xf]
  %v220 = vld [vmem:[%s1 + $0x5e8] sm:$0x11]
  %v221 = vld [vmem:[%s1 + $0x5f0] sm:$0x11]
  %v222 = vld [vmem:[%s1 + $0x5f8] sm:$0x11]
  %v223 = vld [vmem:[%s1 + $0x600] sm:$0x11]
  %v224 = vld [vmem:[%s1 + $0x608] sm:$0x11]
  %v225 = vld [vmem:[%s1 + $0x610] sm:$0x11]
  %v226 = vld [vmem:[%s1 + $0x618] sm:$0x11]
  %v227 = vld [vmem:[%s1 + $0x620] sm:$0x11]
  %v228 = vld [vmem:[%s1 + $0x628] sm:$0x11]
  %v229 = vld [vmem:[%s1 + $0x630] sm:$0x11]
  %v230 = vld [vmem:[%s1 + $0x638] sm:$0x1]
  %v440 = vunpack.c.l.b16 %v22
  %v441 = vunpack.c.h.b16 %v22
  %v442 = vunpack.c.l.b16 %v23
  %v443 = vunpack.c.h.b16 %v23
  %v444 = vunpack.c.l.b16 %v24
  %v445 = vunpack.c.h.b16 %v24
  %v446 = vunpack.c.l.b16 %v25
  %v447 = vunpack.c.h.b16 %v25
  %v448 = vunpack.c.l.b16 %v26
  %v449 = vunpack.c.h.b16 %v26
  %v450 = vunpack.c.l.b16 %v27
  %v451 = vunpack.c.h.b16 %v27
  %v452 = vunpack.c.l.b16 %v28
  %v453 = vunpack.c.h.b16 %v28
  %v454 = vunpack.c.l.b16 %v29
  %v455 = vunpack.c.h.b16 %v29
  %v456 = vunpack.c.l.b16 %v30
  %v457 = vunpack.c.h.b16 %v30
  %v458 = vunpack.c.l.b16 %v31
  %v459 = vunpack.c.h.b16 %v31
  %v460 = vunpack.c.l.b16 %v32
  %v461 = vunpack.c.l.b16 %v33
  %v462 = vunpack.c.h.b16 %v33
  %v463 = vunpack.c.l.b16 %v34
  %v464 = vunpack.c.h.b16 %v34
  %v465 = vunpack.c.l.b16 %v35
  %v466 = vunpack.c.h.b16 %v35
  %v467 = vunpack.c.l.b16 %v36
  %v468 = vunpack.c.h.b16 %v36
  %v469 = vunpack.c.l.b16 %v37
  %v470 = vunpack.c.h.b16 %v37
  %v471 = vunpack.c.l.b16 %v38
  %v472 = vunpack.c.h.b16 %v38
  %v473 = vunpack.c.l.b16 %v39
  %v474 = vunpack.c.h.b16 %v39
  %v475 = vunpack.c.l.b16 %v40
  %v476 = vunpack.c.h.b16 %v40
  %v477 = vunpack.c.l.b16 %v41
  %v478 = vunpack.c.h.b16 %v41
  %v479 = vunpack.c.l.b16 %v42
  %v480 = vunpack.c.h.b16 %v42
  %v481 = vunpack.c.l.b16 %v43
  %v482 = vunpack.c.l.b16 %v44
  %v483 = vunpack.c.h.b16 %v44
  %v484 = vunpack.c.l.b16 %v45
  %v485 = vunpack.c.h.b16 %v45
  %v486 = vunpack.c.l.b16 %v46
  %v487 = vunpack.c.h.b16 %v46
  %v488 = vunpack.c.l.b16 %v47
  %v489 = vunpack.c.h.b16 %v47
  %v490 = vunpack.c.l.b16 %v48
  %v491 = vunpack.c.h.b16 %v48
  %v492 = vunpack.c.l.b16 %v49
  %v493 = vunpack.c.h.b16 %v49
  %v494 = vunpack.c.l.b16 %v50
  %v495 = vunpack.c.h.b16 %v50
  %v496 = vunpack.c.l.b16 %v51
  %v497 = vunpack.c.h.b16 %v51
  %v498 = vunpack.c.l.b16 %v52
  %v499 = vunpack.c.h.b16 %v52
  %v500 = vunpack.c.l.b16 %v53
  %v501 = vunpack.c.h.b16 %v53
  %v502 = vunpack.c.l.b16 %v54
  %v503 = vunpack.c.l.b16 %v55
  %v504 = vunpack.c.h.b16 %v55
  %v505 = vunpack.c.l.b16 %v56
  %v506 = vunpack.c.h.b16 %v56
  %v507 = vunpack.c.l.b16 %v57
  %v508 = vunpack.c.h.b16 %v57
  %v509 = vunpack.c.l.b16 %v58
  %v510 = vunpack.c.h.b16 %v58
  %v511 = vunpack.c.l.b16 %v59
  %v512 = vunpack.c.h.b16 %v59
  %v513 = vunpack.c.l.b16 %v60
  %v514 = vunpack.c.h.b16 %v60
  %v515 = vunpack.c.l.b16 %v61
  %v516 = vunpack.c.h.b16 %v61
  %v517 = vunpack.c.l.b16 %v62
  %v518 = vunpack.c.h.b16 %v62
  %v519 = vunpack.c.l.b16 %v63
  %v520 = vunpack.c.h.b16 %v63
  %v521 = vunpack.c.l.b16 %v64
  %v522 = vunpack.c.h.b16 %v64
  %v523 = vunpack.c.l.b16 %v65
  %v524 = vunpack.c.l.b16 %v66
  %v525 = vunpack.c.h.b16 %v66
  %v526 = vunpack.c.l.b16 %v67
  %v527 = vunpack.c.h.b16 %v67
  %v528 = vunpack.c.l.b16 %v68
  %v529 = vunpack.c.h.b16 %v68
  %v530 = vunpack.c.l.b16 %v69
  %v531 = vunpack.c.h.b16 %v69
  %v532 = vunpack.c.l.b16 %v70
  %v533 = vunpack.c.h.b16 %v70
  %v534 = vunpack.c.l.b16 %v71
  %v535 = vunpack.c.h.b16 %v71
  %v536 = vunpack.c.l.b16 %v72
  %v537 = vunpack.c.h.b16 %v72
  %v538 = vunpack.c.l.b16 %v73
  %v539 = vunpack.c.h.b16 %v73
  %v540 = vunpack.c.l.b16 %v74
  %v541 = vunpack.c.h.b16 %v74
  %v542 = vunpack.c.l.b16 %v75
  %v543 = vunpack.c.h.b16 %v75
  %v544 = vunpack.c.l.b16 %v76
  %v545 = vunpack.c.l.b16 %v77
  %v546 = vunpack.c.h.b16 %v77
  %v547 = vunpack.c.l.b16 %v78
  %v548 = vunpack.c.h.b16 %v78
  %v549 = vunpack.c.l.b16 %v79
  %v550 = vunpack.c.h.b16 %v79
  %v551 = vunpack.c.l.b16 %v80
  %v552 = vunpack.c.h.b16 %v80
  %v553 = vunpack.c.l.b16 %v81
  %v554 = vunpack.c.h.b16 %v81
  %v555 = vunpack.c.l.b16 %v82
  %v556 = vunpack.c.h.b16 %v82
  %v557 = vunpack.c.l.b16 %v83
  %v558 = vunpack.c.h.b16 %v83
  %v559 = vunpack.c.l.b16 %v84
  %v560 = vunpack.c.h.b16 %v84
  %v561 = vunpack.c.l.b16 %v85
  %v562 = vunpack.c.h.b16 %v85
  %v563 = vunpack.c.l.b16 %v86
  %v564 = vunpack.c.h.b16 %v86
  %v565 = vunpack.c.l.b16 %v87
  %v566 = vunpack.c.l.b16 %v88
  %v567 = vunpack.c.h.b16 %v88
  %v568 = vunpack.c.l.b16 %v89
  %v569 = vunpack.c.h.b16 %v89
  %v570 = vunpack.c.l.b16 %v90
  %v571 = vunpack.c.h.b16 %v90
  %v572 = vunpack.c.l.b16 %v91
  %v573 = vunpack.c.h.b16 %v91
  %v574 = vunpack.c.l.b16 %v92
  %v575 = vunpack.c.h.b16 %v92
  %v576 = vunpack.c.l.b16 %v93
  %v577 = vunpack.c.h.b16 %v93
  %v578 = vunpack.c.l.b16 %v94
  %v579 = vunpack.c.h.b16 %v94
  %v580 = vunpack.c.l.b16 %v95
  %v581 = vunpack.c.h.b16 %v95
  %v582 = vunpack.c.l.b16 %v96
  %v583 = vunpack.c.h.b16 %v96
  %v584 = vunpack.c.l.b16 %v97
  %v585 = vunpack.c.h.b16 %v97
  %v586 = vunpack.c.l.b16 %v98
  %v587 = vunpack.c.l.b16 %v99
  %v588 = vunpack.c.h.b16 %v99
  %v589 = vunpack.c.l.b16 %v100
  %v590 = vunpack.c.h.b16 %v100
  %v591 = vunpack.c.l.b16 %v101
  %v592 = vunpack.c.h.b16 %v101
  %v593 = vunpack.c.l.b16 %v102
  %v594 = vunpack.c.h.b16 %v102
  %v595 = vunpack.c.l.b16 %v103
  %v596 = vunpack.c.h.b16 %v103
  %v597 = vunpack.c.l.b16 %v104
  %v598 = vunpack.c.h.b16 %v104
  %v599 = vunpack.c.l.b16 %v105
  %v600 = vunpack.c.h.b16 %v105
  %v601 = vunpack.c.l.b16 %v106
  %v602 = vunpack.c.h.b16 %v106
  %v603 = vunpack.c.l.b16 %v107
  %v604 = vunpack.c.h.b16 %v107
  %v605 = vunpack.c.l.b16 %v108
  %v606 = vunpack.c.h.b16 %v108
  %v607 = vunpack.c.l.b16 %v109
  %v608 = vunpack.c.l.b16 %v110
  %v609 = vunpack.c.h.b16 %v110
  %v610 = vunpack.c.l.b16 %v111
  %v611 = vunpack.c.h.b16 %v111
  %v612 = vunpack.c.l.b16 %v112
  %v613 = vunpack.c.h.b16 %v112
  %v614 = vunpack.c.l.b16 %v113
  %v615 = vunpack.c.h.b16 %v113
  %v616 = vunpack.c.l.b16 %v114
  %v617 = vunpack.c.h.b16 %v114
  %v618 = vunpack.c.l.b16 %v115
  %v619 = vunpack.c.h.b16 %v115
  %v620 = vunpack.c.l.b16 %v116
  %v621 = vunpack.c.h.b16 %v116
  %v622 = vunpack.c.l.b16 %v117
  %v623 = vunpack.c.h.b16 %v117
  %v624 = vunpack.c.l.b16 %v118
  %v625 = vunpack.c.h.b16 %v118
  %v626 = vunpack.c.l.b16 %v119
  %v627 = vunpack.c.h.b16 %v119
  %v628 = vunpack.c.l.b16 %v120
  %v629 = vunpack.c.l.b16 %v121
  %v630 = vunpack.c.h.b16 %v121
  %v631 = vunpack.c.l.b16 %v122
  %v632 = vunpack.c.h.b16 %v122
  %v633 = vunpack.c.l.b16 %v123
  %v634 = vunpack.c.h.b16 %v123
  %v635 = vunpack.c.l.b16 %v124
  %v636 = vunpack.c.h.b16 %v124
  %v637 = vunpack.c.l.b16 %v125
  %v638 = vunpack.c.h.b16 %v125
  %v639 = vunpack.c.l.b16 %v126
  %v640 = vunpack.c.h.b16 %v126
  %v641 = vunpack.c.l.b16 %v127
  %v642 = vunpack.c.h.b16 %v127
  %v643 = vunpack.c.l.b16 %v128
  %v644 = vunpack.c.h.b16 %v128
  %v645 = vunpack.c.l.b16 %v129
  %v646 = vunpack.c.h.b16 %v129
  %v647 = vunpack.c.l.b16 %v130
  %v648 = vunpack.c.h.b16 %v130
  %v649 = vunpack.c.l.b16 %v131
  %v650 = vunpack.c.l.b16 %v132
  %v651 = vunpack.c.h.b16 %v132
  %v652 = vunpack.c.l.b16 %v133
  %v653 = vunpack.c.h.b16 %v133
  %v654 = vunpack.c.l.b16 %v134
  %v655 = vunpack.c.h.b16 %v134
  %v656 = vunpack.c.l.b16 %v135
  %v657 = vunpack.c.h.b16 %v135
  %v658 = vunpack.c.l.b16 %v136
  %v659 = vunpack.c.h.b16 %v136
  %v660 = vunpack.c.l.b16 %v137
  %v661 = vunpack.c.h.b16 %v137
  %v662 = vunpack.c.l.b16 %v138
  %v663 = vunpack.c.h.b16 %v138
  %v664 = vunpack.c.l.b16 %v139
  %v665 = vunpack.c.h.b16 %v139
  %v666 = vunpack.c.l.b16 %v140
  %v667 = vunpack.c.h.b16 %v140
  %v668 = vunpack.c.l.b16 %v141
  %v669 = vunpack.c.h.b16 %v141
  %v670 = vunpack.c.l.b16 %v142
  %v671 = vunpack.c.l.b16 %v143
  %v672 = vunpack.c.h.b16 %v143
  %v673 = vunpack.c.l.b16 %v144
  %v674 = vunpack.c.h.b16 %v144
  %v675 = vunpack.c.l.b16 %v145
  %v676 = vunpack.c.h.b16 %v145
  %v677 = vunpack.c.l.b16 %v146
  %v678 = vunpack.c.h.b16 %v146
  %v679 = vunpack.c.l.b16 %v147
  %v680 = vunpack.c.h.b16 %v147
  %v681 = vunpack.c.l.b16 %v148
  %v682 = vunpack.c.h.b16 %v148
  %v683 = vunpack.c.l.b16 %v149
  %v684 = vunpack.c.h.b16 %v149
  %v685 = vunpack.c.l.b16 %v150
  %v686 = vunpack.c.h.b16 %v150
  %v687 = vunpack.c.l.b16 %v151
  %v688 = vunpack.c.h.b16 %v151
  %v689 = vunpack.c.l.b16 %v152
  %v690 = vunpack.c.h.b16 %v152
  %v691 = vunpack.c.l.b16 %v153
  %v692 = vunpack.c.l.b16 %v154
  %v693 = vunpack.c.h.b16 %v154
  %v694 = vunpack.c.l.b16 %v155
  %v695 = vunpack.c.h.b16 %v155
  %v696 = vunpack.c.l.b16 %v156
  %v697 = vunpack.c.h.b16 %v156
  %v698 = vunpack.c.l.b16 %v157
  %v699 = vunpack.c.h.b16 %v157
  %v700 = vunpack.c.l.b16 %v158
  %v701 = vunpack.c.h.b16 %v158
  %v702 = vunpack.c.l.b16 %v159
  %v703 = vunpack.c.h.b16 %v159
  %v704 = vunpack.c.l.b16 %v160
  %v705 = vunpack.c.h.b16 %v160
  %v706 = vunpack.c.l.b16 %v161
  %v707 = vunpack.c.h.b16 %v161
  %v708 = vunpack.c.l.b16 %v162
  %v709 = vunpack.c.h.b16 %v162
  %v710 = vunpack.c.l.b16 %v163
  %v711 = vunpack.c.h.b16 %v163
  %v712 = vunpack.c.l.b16 %v164
  %v713 = vunpack.c.l.b16 %v165
  %v714 = vunpack.c.h.b16 %v165
  %v715 = vunpack.c.l.b16 %v166
  %v716 = vunpack.c.h.b16 %v166
  %v717 = vunpack.c.l.b16 %v167
  %v718 = vunpack.c.h.b16 %v167
  %v719 = vunpack.c.l.b16 %v168
  %v720 = vunpack.c.h.b16 %v168
  %v721 = vunpack.c.l.b16 %v169
  %v722 = vunpack.c.h.b16 %v169
  %v723 = vunpack.c.l.b16 %v170
  %v724 = vunpack.c.h.b16 %v170
  %v725 = vunpack.c.l.b16 %v171
  %v726 = vunpack.c.h.b16 %v171
  %v727 = vunpack.c.l.b16 %v172
  %v728 = vunpack.c.h.b16 %v172
  %v729 = vunpack.c.l.b16 %v173
  %v730 = vunpack.c.h.b16 %v173
  %v731 = vunpack.c.l.b16 %v174
  %v732 = vunpack.c.h.b16 %v174
  %v733 = vunpack.c.l.b16 %v175
  %v734 = vunpack.c.l.b16 %v176
  %v735 = vunpack.c.h.b16 %v176
  %v736 = vunpack.c.l.b16 %v177
  %v737 = vunpack.c.h.b16 %v177
  %v738 = vunpack.c.l.b16 %v178
  %v739 = vunpack.c.h.b16 %v178
  %v740 = vunpack.c.l.b16 %v179
  %v741 = vunpack.c.h.b16 %v179
  %v742 = vunpack.c.l.b16 %v180
  %v743 = vunpack.c.h.b16 %v180
  %v744 = vunpack.c.l.b16 %v181
  %v745 = vunpack.c.h.b16 %v181
  %v746 = vunpack.c.l.b16 %v182
  %v747 = vunpack.c.h.b16 %v182
  %v748 = vunpack.c.l.b16 %v183
  %v749 = vunpack.c.h.b16 %v183
  %v750 = vunpack.c.l.b16 %v184
  %v751 = vunpack.c.h.b16 %v184
  %v752 = vunpack.c.l.b16 %v185
  %v753 = vunpack.c.h.b16 %v185
  %v754 = vunpack.c.l.b16 %v186
  %v755 = vunpack.c.l.b16 %v187
  %v756 = vunpack.c.h.b16 %v187
  %v757 = vunpack.c.l.b16 %v188
  %v758 = vunpack.c.h.b16 %v188
  %v759 = vunpack.c.l.b16 %v189
  %v760 = vunpack.c.h.b16 %v189
  %v761 = vunpack.c.l.b16 %v190
  %v762 = vunpack.c.h.b16 %v190
  %v763 = vunpack.c.l.b16 %v191
  %v764 = vunpack.c.h.b16 %v191
  %v765 = vunpack.c.l.b16 %v192
  %v766 = vunpack.c.h.b16 %v192
  %v767 = vunpack.c.l.b16 %v193
  %v768 = vunpack.c.h.b16 %v193
  %v769 = vunpack.c.l.b16 %v194
  %v770 = vunpack.c.h.b16 %v194
  %v771 = vunpack.c.l.b16 %v195
  %v772 = vunpack.c.h.b16 %v195
  %v773 = vunpack.c.l.b16 %v196
  %v774 = vunpack.c.h.b16 %v196
  %v775 = vunpack.c.l.b16 %v197
  %v776 = vunpack.c.l.b16 %v198
  %v777 = vunpack.c.h.b16 %v198
  %v778 = vunpack.c.l.b16 %v199
  %v779 = vunpack.c.h.b16 %v199
  %v780 = vunpack.c.l.b16 %v200
  %v781 = vunpack.c.h.b16 %v200
  %v782 = vunpack.c.l.b16 %v201
  %v783 = vunpack.c.h.b16 %v201
  %v784 = vunpack.c.l.b16 %v202
  %v785 = vunpack.c.h.b16 %v202
  %v786 = vunpack.c.l.b16 %v203
  %v787 = vunpack.c.h.b16 %v203
  %v788 = vunpack.c.l.b16 %v204
  %v789 = vunpack.c.h.b16 %v204
  %v790 = vunpack.c.l.b16 %v205
  %v791 = vunpack.c.h.b16 %v205
  %v792 = vunpack.c.l.b16 %v206
  %v793 = vunpack.c.h.b16 %v206
  %v794 = vunpack.c.l.b16 %v207
  %v795 = vunpack.c.h.b16 %v207
  %v796 = vunpack.c.l.b16 %v208
  %v797 = vunpack.c.l.b16 %v209
  %v798 = vunpack.c.h.b16 %v209
  %v799 = vunpack.c.l.b16 %v210
  %v800 = vunpack.c.h.b16 %v210
  %v801 = vunpack.c.l.b16 %v211
  %v802 = vunpack.c.h.b16 %v211
  %v803 = vunpack.c.l.b16 %v212
  %v804 = vunpack.c.h.b16 %v212
  %v805 = vunpack.c.l.b16 %v213
  %v806 = vunpack.c.h.b16 %v213
  %v807 = vunpack.c.l.b16 %v214
  %v808 = vunpack.c.h.b16 %v214
  %v809 = vunpack.c.l.b16 %v215
  %v810 = vunpack.c.h.b16 %v215
  %v811 = vunpack.c.l.b16 %v216
  %v812 = vunpack.c.h.b16 %v216
  %v813 = vunpack.c.l.b16 %v217
  %v814 = vunpack.c.h.b16 %v217
  %v815 = vunpack.c.l.b16 %v218
  %v816 = vunpack.c.h.b16 %v218
  %v817 = vunpack.c.l.b16 %v219
  %v818 = vunpack.c.l.b16 %v220
  %v819 = vunpack.c.h.b16 %v220
  %v820 = vunpack.c.l.b16 %v221
  %v821 = vunpack.c.h.b16 %v221
  %v822 = vunpack.c.l.b16 %v222
  %v823 = vunpack.c.h.b16 %v222
  %v824 = vunpack.c.l.b16 %v223
  %v825 = vunpack.c.h.b16 %v223
  %v826 = vunpack.c.l.b16 %v224
  %v827 = vunpack.c.h.b16 %v224
  %v828 = vunpack.c.l.b16 %v225
  %v829 = vunpack.c.h.b16 %v225
  %v830 = vunpack.c.l.b16 %v226
  %v831 = vunpack.c.h.b16 %v226
  %v832 = vunpack.c.l.b16 %v227
  %v833 = vunpack.c.h.b16 %v227
  %v834 = vunpack.c.l.b16 %v228
  %v835 = vunpack.c.h.b16 %v228
  %v836 = vunpack.c.l.b16 %v229
  %v837 = vunpack.c.h.b16 %v229
  %v838 = vunpack.c.l.b16 %v230
  %v839 = vpack.c.b16 %v461, %v440
  %v840 = vpack.c.b16 %v462, %v441
  %v841 = vpack.c.b16 %v463, %v442
  %v842 = vpack.c.b16 %v464, %v443
  %v843 = vpack.c.b16 %v465, %v444
  %v844 = vpack.c.b16 %v466, %v445
  %v845 = vpack.c.b16 %v467, %v446
  %v846 = vpack.c.b16 %v468, %v447
  %v847 = vpack.c.b16 %v469, %v448
  %v848 = vpack.c.b16 %v470, %v449
  %v849 = vpack.c.b16 %v471, %v450
  %v850 = vpack.c.b16 %v472, %v451
  %v851 = vpack.c.b16 %v473, %v452
  %v852 = vpack.c.b16 %v474, %v453
  %v853 = vpack.c.b16 %v475, %v454
  %v854 = vpack.c.b16 %v476, %v455
  %v855 = vpack.c.b16 %v477, %v456
  %v856 = vpack.c.b16 %v478, %v457
  %v857 = vpack.c.b16 %v479, %v458
  %v858 = vpack.c.b16 %v480, %v459
  %v859 = vpack.c.b16 %v481, %v460
  %v860 = vpack.c.b16 %v503, %v482
  %v861 = vpack.c.b16 %v504, %v483
  %v862 = vpack.c.b16 %v505, %v484
  %v863 = vpack.c.b16 %v506, %v485
  %v864 = vpack.c.b16 %v507, %v486
  %v865 = vpack.c.b16 %v508, %v487
  %v866 = vpack.c.b16 %v509, %v488
  %v867 = vpack.c.b16 %v510, %v489
  %v868 = vpack.c.b16 %v511, %v490
  %v869 = vpack.c.b16 %v512, %v491
  %v870 = vpack.c.b16 %v513, %v492
  %v871 = vpack.c.b16 %v514, %v493
  %v872 = vpack.c.b16 %v515, %v494
  %v873 = vpack.c.b16 %v516, %v495
  %v874 = vpack.c.b16 %v517, %v496
  %v875 = vpack.c.b16 %v518, %v497
  %v876 = vpack.c.b16 %v519, %v498
  %v877 = vpack.c.b16 %v520, %v499
  %v878 = vpack.c.b16 %v521, %v500
  %v879 = vpack.c.b16 %v522, %v501
  %v880 = vpack.c.b16 %v523, %v502
  %v881 = vpack.c.b16 %v545, %v524
  %v882 = vpack.c.b16 %v546, %v525
  %v883 = vpack.c.b16 %v547, %v526
  %v884 = vpack.c.b16 %v548, %v527
  %v885 = vpack.c.b16 %v549, %v528
  %v886 = vpack.c.b16 %v550, %v529
  %v887 = vpack.c.b16 %v551, %v530
  %v888 = vpack.c.b16 %v552, %v531
  %v889 = vpack.c.b16 %v553, %v532
  %v890 = vpack.c.b16 %v554, %v533
  %v891 = vpack.c.b16 %v555, %v534
  %v892 = vpack.c.b16 %v556, %v535
  %v893 = vpack.c.b16 %v557, %v536
  %v894 = vpack.c.b16 %v558, %v537
  %v895 = vpack.c.b16 %v559, %v538
  %v896 = vpack.c.b16 %v560, %v539
  %v897 = vpack.c.b16 %v561, %v540
  %v898 = vpack.c.b16 %v562, %v541
  %v899 = vpack.c.b16 %v563, %v542
  %v900 = vpack.c.b16 %v564, %v543
  %v901 = vpack.c.b16 %v565, %v544
  %v902 = vpack.c.b16 %v587, %v566
  %v903 = vpack.c.b16 %v588, %v567
  %v904 = vpack.c.b16 %v589, %v568
  %v905 = vpack.c.b16 %v590, %v569
  %v906 = vpack.c.b16 %v591, %v570
  %v907 = vpack.c.b16 %v592, %v571
  %v908 = vpack.c.b16 %v593, %v572
  %v909 = vpack.c.b16 %v594, %v573
  %v910 = vpack.c.b16 %v595, %v574
  %v911 = vpack.c.b16 %v596, %v575
  %v912 = vpack.c.b16 %v597, %v576
  %v913 = vpack.c.b16 %v598, %v577
  %v914 = vpack.c.b16 %v599, %v578
  %v915 = vpack.c.b16 %v600, %v579
  %v916 = vpack.c.b16 %v601, %v580
  %v917 = vpack.c.b16 %v602, %v581
  %v918 = vpack.c.b16 %v603, %v582
  %v919 = vpack.c.b16 %v604, %v583
  %v920 = vpack.c.b16 %v605, %v584
  %v921 = vpack.c.b16 %v606, %v585
  %v922 = vpack.c.b16 %v607, %v586
  %v923 = vpack.c.b16 %v629, %v608
  %v924 = vpack.c.b16 %v630, %v609
  %v925 = vpack.c.b16 %v631, %v610
  %v926 = vpack.c.b16 %v632, %v611
  %v927 = vpack.c.b16 %v633, %v612
  %v928 = vpack.c.b16 %v634, %v613
  %v929 = vpack.c.b16 %v635, %v614
  %v930 = vpack.c.b16 %v636, %v615
  %v931 = vpack.c.b16 %v637, %v616
  %v932 = vpack.c.b16 %v638, %v617
  %v933 = vpack.c.b16 %v639, %v618
  %v934 = vpack.c.b16 %v640, %v619
  %v935 = vpack.c.b16 %v641, %v620
  %v936 = vpack.c.b16 %v642, %v621
  %v937 = vpack.c.b16 %v643, %v622
  %v938 = vpack.c.b16 %v644, %v623
  %v939 = vpack.c.b16 %v645, %v624
  %v940 = vpack.c.b16 %v646, %v625
  %v941 = vpack.c.b16 %v647, %v626
  %v942 = vpack.c.b16 %v648, %v627
  %v943 = vpack.c.b16 %v649, %v628
  %v944 = vpack.c.b16 %v671, %v650
  %v945 = vpack.c.b16 %v672, %v651
  %v946 = vpack.c.b16 %v673, %v652
  %v947 = vpack.c.b16 %v674, %v653
  %v948 = vpack.c.b16 %v675, %v654
  %v949 = vpack.c.b16 %v676, %v655
  %v950 = vpack.c.b16 %v677, %v656
  %v951 = vpack.c.b16 %v678, %v657
  %v952 = vpack.c.b16 %v679, %v658
  %v953 = vpack.c.b16 %v680, %v659
  %v954 = vpack.c.b16 %v681, %v660
  %v955 = vpack.c.b16 %v682, %v661
  %v956 = vpack.c.b16 %v683, %v662
  %v957 = vpack.c.b16 %v684, %v663
  %v958 = vpack.c.b16 %v685, %v664
  %v959 = vpack.c.b16 %v686, %v665
  %v960 = vpack.c.b16 %v687, %v666
  %v961 = vpack.c.b16 %v688, %v667
  %v962 = vpack.c.b16 %v689, %v668
  %v963 = vpack.c.b16 %v690, %v669
  %v964 = vpack.c.b16 %v691, %v670
  %v965 = vpack.c.b16 %v713, %v692
  %v966 = vpack.c.b16 %v714, %v693
  %v967 = vpack.c.b16 %v715, %v694
  %v968 = vpack.c.b16 %v716, %v695
  %v969 = vpack.c.b16 %v717, %v696
  %v970 = vpack.c.b16 %v718, %v697
  %v971 = vpack.c.b16 %v719, %v698
  %v972 = vpack.c.b16 %v720, %v699
  %v973 = vpack.c.b16 %v721, %v700
  %v974 = vpack.c.b16 %v722, %v701
  %v975 = vpack.c.b16 %v723, %v702
  %v976 = vpack.c.b16 %v724, %v703
  %v977 = vpack.c.b16 %v725, %v704
  %v978 = vpack.c.b16 %v726, %v705
  %v979 = vpack.c.b16 %v727, %v706
  %v980 = vpack.c.b16 %v728, %v707
  %v981 = vpack.c.b16 %v729, %v708
  %v982 = vpack.c.b16 %v730, %v709
  %v983 = vpack.c.b16 %v731, %v710
  %v984 = vpack.c.b16 %v732, %v711
  %v985 = vpack.c.b16 %v733, %v712
  %v986 = vpack.c.b16 %v755, %v734
  %v987 = vpack.c.b16 %v756, %v735
  %v988 = vpack.c.b16 %v757, %v736
  %v989 = vpack.c.b16 %v758, %v737
  %v990 = vpack.c.b16 %v759, %v738
  %v991 = vpack.c.b16 %v760, %v739
  %v992 = vpack.c.b16 %v761, %v740
  %v993 = vpack.c.b16 %v762, %v741
  %v994 = vpack.c.b16 %v763, %v742
  %v995 = vpack.c.b16 %v764, %v743
  %v996 = vpack.c.b16 %v765, %v744
  %v997 = vpack.c.b16 %v766, %v745
  %v998 = vpack.c.b16 %v767, %v746
  %v999 = vpack.c.b16 %v768, %v747
  %v1000 = vpack.c.b16 %v769, %v748
  %v1001 = vpack.c.b16 %v770, %v749
  %v1002 = vpack.c.b16 %v771, %v750
  %v1003 = vpack.c.b16 %v772, %v751
  %v1004 = vpack.c.b16 %v773, %v752
  %v1005 = vpack.c.b16 %v774, %v753
  %v1006 = vpack.c.b16 %v775, %v754
  %v1007 = vpack.c.b16 %v797, %v776
  %v1008 = vpack.c.b16 %v798, %v777
  %v1009 = vpack.c.b16 %v799, %v778
  %v1010 = vpack.c.b16 %v800, %v779
  %v1011 = vpack.c.b16 %v801, %v780
  %v1012 = vpack.c.b16 %v802, %v781
  %v1013 = vpack.c.b16 %v803, %v782
  %v1014 = vpack.c.b16 %v804, %v783
  %v1015 = vpack.c.b16 %v805, %v784
  %v1016 = vpack.c.b16 %v806, %v785
  %v1017 = vpack.c.b16 %v807, %v786
  %v1018 = vpack.c.b16 %v808, %v787
  %v1019 = vpack.c.b16 %v809, %v788
  %v1020 = vpack.c.b16 %v810, %v789
  %v1021 = vpack.c.b16 %v811, %v790
  %v1022 = vpack.c.b16 %v812, %v791
  %v1023 = vpack.c.b16 %v813, %v792
  %v1024 = vpack.c.b16 %v814, %v793
  %v1025 = vpack.c.b16 %v815, %v794
  %v1026 = vpack.c.b16 %v816, %v795
  %v1027 = vpack.c.b16 %v817, %v796
  %v1028 = vpack.c.b16 %v818, %v818
  %v1029 = vpack.c.b16 %v819, %v819
  %v1030 = vpack.c.b16 %v820, %v820
  %v1031 = vpack.c.b16 %v821, %v821
  %v1032 = vpack.c.b16 %v822, %v822
  %v1033 = vpack.c.b16 %v823, %v823
  %v1034 = vpack.c.b16 %v824, %v824
  %v1035 = vpack.c.b16 %v825, %v825
  %v1036 = vpack.c.b16 %v826, %v826
  %v1037 = vpack.c.b16 %v827, %v827
  %v1038 = vpack.c.b16 %v828, %v828
  %v1039 = vpack.c.b16 %v829, %v829
  %v1040 = vpack.c.b16 %v830, %v830
  %v1041 = vpack.c.b16 %v831, %v831
  %v1042 = vpack.c.b16 %v832, %v832
  %v1043 = vpack.c.b16 %v833, %v833
  %v1044 = vpack.c.b16 %v834, %v834
  %v1045 = vpack.c.b16 %v835, %v835
  %v1046 = vpack.c.b16 %v836, %v836
  %v1047 = vpack.c.b16 %v837, %v837
  %v1048 = vpack.c.b16 %v838, %v838
  %vm1238 = vcmask 146432
  %v1240 = vsel %vm1238, %v21, 0
  %vm1242 = vcmask 1040384
  %v1244 = vsel %vm1242, %v1028, 0
  %v1247 = vsel %vm1242, %v1029, 0
  %v1250 = vsel %vm1242, %v1030, 0
  %v1253 = vsel %vm1242, %v1031, 0
  %v1256 = vsel %vm1242, %v1032, 0
  %v1259 = vsel %vm1242, %v1033, 0
  %v1262 = vsel %vm1242, %v1034, 0
  %v1265 = vsel %vm1242, %v1035, 0
  %v1268 = vsel %vm1242, %v1036, 0
  %v1271 = vsel %vm1242, %v1037, 0
  %v1274 = vsel %vm1242, %v1038, 0
  %v1277 = vsel %vm1242, %v1039, 0
  %v1280 = vsel %vm1242, %v1040, 0
  %v1283 = vsel %vm1242, %v1041, 0
  %v1286 = vsel %vm1242, %v1042, 0
  %v1289 = vsel %vm1242, %v1043, 0
  %v1292 = vsel %vm1242, %v1044, 0
  %v1295 = vsel %vm1242, %v1045, 0
  %v1298 = vsel %vm1242, %v1046, 0
  %v1301 = vsel %vm1242, %v1047, 0
  %v1304 = vsel %vm1242, %v1048, 0
  %1306 = vmatprep.subr.bf16.mxu0 %v840
  %1307 = vmatpush1.bf16.msra.mxu0 %v839
  %1308 = vmatprep.subr.bf16.mxu0 %v861
  %1309 = vmatpush1.bf16.msra.mxu0 %v860
  %1310 = vmatprep.subr.bf16.mxu0 %v882
  %1311 = vmatpush1.bf16.msra.mxu0 %v881
  %1312 = vmatprep.subr.bf16.mxu0 %v903
  %1313 = vmatpush1.bf16.msra.mxu0 %v902
  %1314 = vmatprep.subr.bf16.mxu0 %v924
  %1315 = vmatpush1.bf16.msra.mxu0 %v923
  %1316 = vmatprep.subr.bf16.mxu0 %v945
  %1317 = vmatpush1.bf16.msra.mxu0 %v944
  %1318 = vmatprep.subr.bf16.mxu0 %v966
  %1319 = vmatpush1.bf16.msra.mxu0 %v965
  %1320 = vmatprep.subr.bf16.mxu0 %v987
  %1321 = vmatpush1.bf16.msra.mxu0 %v986
  %1322 = vmatprep.subr.bf16.mxu0 %v1008
  %1323 = vmatpush1.bf16.msra.mxu0 %v1007
  %1324 = vmatprep.subr.bf16.mxu0 %v1247
  %1325 = vmatpush1.bf16.msra.mxu0 %v1244
  %1326 = vmatprep.subr.bf16.mxu0 0
  %1327 = vmatpush1.bf16.msra.mxu0 0
  %1328 = vmatprep.subr.bf16.mxu0 0
  %1329 = vmatpush1.bf16.msra.mxu0 0
  %1330 = vmatprep.subr.bf16.mxu0 0
  %1331 = vmatpush1.bf16.msra.mxu0 0
  %1332 = vmatprep.subr.bf16.mxu0 0
  %1333 = vmatpush1.bf16.msra.mxu0 0
  %1334 = vmatprep.subr.bf16.mxu0 0
  %1335 = vmatpush1.bf16.msra.mxu0 0
  %1336 = vmatprep.subr.bf16.mxu0 0
  %1337 = vmatpush1.bf16.msra.mxu0 0
  %1338 = vmatprep.mubr.bf16.mxu0 %v1240
  %1339 = vmatmul.mubr.bf16.gmra.mrb[0].mxu0 %v20
  %v1340 = vpop.f32.mrb[0].mxu0
  %v1341 = vadd.f32 0.0, %v1340
  %v1342 = vpop.f32.mrb[0].mxu0
  %v1343 = vadd.f32 0.0, %v1342
  %v1344 = vpop.f32.mrb[0].mxu0
  %v1345 = vpop.f32.mrb[0].mxu0
  %1346 = vdwg.mxu0
  %1347 = vmatprep.subr.bf16.mxu0 %v842
  %1348 = vmatpush1.bf16.msra.mxu0 %v841
  %1349 = vmatprep.subr.bf16.mxu0 %v863
  %1350 = vmatpush1.bf16.msra.mxu0 %v862
  %1351 = vmatprep.subr.bf16.mxu0 %v884
  %1352 = vmatpush1.bf16.msra.mxu0 %v883
  %1353 = vmatprep.subr.bf16.mxu0 %v905
  %1354 = vmatpush1.bf16.msra.mxu0 %v904
  %1355 = vmatprep.subr.bf16.mxu0 %v926
  %1356 = vmatpush1.bf16.msra.mxu0 %v925
  %1357 = vmatprep.subr.bf16.mxu0 %v947
  %1358 = vmatpush1.bf16.msra.mxu0 %v946
  %1359 = vmatprep.subr.bf16.mxu0 %v968
  %1360 = vmatpush1.bf16.msra.mxu0 %v967
  %1361 = vmatprep.subr.bf16.mxu0 %v989
  %1362 = vmatpush1.bf16.msra.mxu0 %v988
  %1363 = vmatprep.subr.bf16.mxu0 %v1010
  %1364 = vmatpush1.bf16.msra.mxu0 %v1009
  %1365 = vmatprep.subr.bf16.mxu0 %v1253
  %1366 = vmatpush1.bf16.msra.mxu0 %v1250
  %1367 = vmatprep.subr.bf16.mxu0 0
  %1368 = vmatpush1.bf16.msra.mxu0 0
  %1369 = vmatprep.subr.bf16.mxu0 0
  %1370 = vmatpush1.bf16.msra.mxu0 0
  %1371 = vmatprep.subr.bf16.mxu0 0
  %1372 = vmatpush1.bf16.msra.mxu0 0
  %1373 = vmatprep.subr.bf16.mxu0 0
  %1374 = vmatpush1.bf16.msra.mxu0 0
  %1375 = vmatprep.subr.bf16.mxu0 0
  %1376 = vmatpush1.bf16.msra.mxu0 0
  %1377 = vmatprep.subr.bf16.mxu0 0
  %1378 = vmatpush1.bf16.msra.mxu0 0
  %1379 = vmatprep.mubr.bf16.mxu0 %v1240
  %1380 = vmatmul.mubr.bf16.gmra.mrb[0].mxu0 %v20
  %v1381 = vpop.f32.mrb[0].mxu0
  %v1382 = vadd.f32 0.0, %v1381
  %v1383 = vpop.f32.mrb[0].mxu0
  %v1384 = vadd.f32 0.0, %v1383
  %v1385 = vpop.f32.mrb[0].mxu0
  %v1386 = vpop.f32.mrb[0].mxu0
  %1387 = vdwg.mxu0
  %1388 = vmatprep.subr.bf16.mxu0 %v844
  %1389 = vmatpush1.bf16.msra.mxu0 %v843
  %1390 = vmatprep.subr.bf16.mxu0 %v865
  %1391 = vmatpush1.bf16.msra.mxu0 %v864
  %1392 = vmatprep.subr.bf16.mxu0 %v886
  %1393 = vmatpush1.bf16.msra.mxu0 %v885
  %1394 = vmatprep.subr.bf16.mxu0 %v907
  %1395 = vmatpush1.bf16.msra.mxu0 %v906
  %1396 = vmatprep.subr.bf16.mxu0 %v928
  %1397 = vmatpush1.bf16.msra.mxu0 %v927
  %1398 = vmatprep.subr.bf16.mxu0 %v949
  %1399 = vmatpush1.bf16.msra.mxu0 %v948
  %1400 = vmatprep.subr.bf16.mxu0 %v970
  %1401 = vmatpush1.bf16.msra.mxu0 %v969
  %1402 = vmatprep.subr.bf16.mxu0 %v991
  %1403 = vmatpush1.bf16.msra.mxu0 %v990
  %1404 = vmatprep.subr.bf16.mxu0 %v1012
  %1405 = vmatpush1.bf16.msra.mxu0 %v1011
  %1406 = vmatprep.subr.bf16.mxu0 %v1259
  %1407 = vmatpush1.bf16.msra.mxu0 %v1256
  %1408 = vmatprep.subr.bf16.mxu0 0
  %1409 = vmatpush1.bf16.msra.mxu0 0
  %1410 = vmatprep.subr.bf16.mxu0 0
  %1411 = vmatpush1.bf16.msra.mxu0 0
  %1412 = vmatprep.subr.bf16.mxu0 0
  %1413 = vmatpush1.bf16.msra.mxu0 0
  %1414 = vmatprep.subr.bf16.mxu0 0
  %1415 = vmatpush1.bf16.msra.mxu0 0
  %1416 = vmatprep.subr.bf16.mxu0 0
  %1417 = vmatpush1.bf16.msra.mxu0 0
  %1418 = vmatprep.subr.bf16.mxu0 0
  %1419 = vmatpush1.bf16.msra.mxu0 0
  %1420 = vmatprep.mubr.bf16.mxu0 %v1240
  %1421 = vmatmul.mubr.bf16.gmra.mrb[0].mxu0 %v20
  %v1422 = vpop.f32.mrb[0].mxu0
  %v1423 = vadd.f32 0.0, %v1422
  %v1424 = vpop.f32.mrb[0].mxu0
  %v1425 = vadd.f32 0.0, %v1424
  %v1426 = vpop.f32.mrb[0].mxu0
  %v1427 = vpop.f32.mrb[0].mxu0
  %1428 = vdwg.mxu0
  %1429 = vmatprep.subr.bf16.mxu0 %v846
  %1430 = vmatpush1.bf16.msra.mxu0 %v845
  %1431 = vmatprep.subr.bf16.mxu0 %v867
  %1432 = vmatpush1.bf16.msra.mxu0 %v866
  %1433 = vmatprep.subr.bf16.mxu0 %v888
  %1434 = vmatpush1.bf16.msra.mxu0 %v887
  %1435 = vmatprep.subr.bf16.mxu0 %v909
  %1436 = vmatpush1.bf16.msra.mxu0 %v908
  %1437 = vmatprep.subr.bf16.mxu0 %v930
  %1438 = vmatpush1.bf16.msra.mxu0 %v929
  %1439 = vmatprep.subr.bf16.mxu0 %v951
  %1440 = vmatpush1.bf16.msra.mxu0 %v950
  %1441 = vmatprep.subr.bf16.mxu0 %v972
  %1442 = vmatpush1.bf16.msra.mxu0 %v971
  %1443 = vmatprep.subr.bf16.mxu0 %v993
  %1444 = vmatpush1.bf16.msra.mxu0 %v992
  %1445 = vmatprep.subr.bf16.mxu0 %v1014
  %1446 = vmatpush1.bf16.msra.mxu0 %v1013
  %1447 = vmatprep.subr.bf16.mxu0 %v1265
  %1448 = vmatpush1.bf16.msra.mxu0 %v1262
  %1449 = vmatprep.subr.bf16.mxu0 0
  %1450 = vmatpush1.bf16.msra.mxu0 0
  %1451 = vmatprep.subr.bf16.mxu0 0
  %1452 = vmatpush1.bf16.msra.mxu0 0
  %1453 = vmatprep.subr.bf16.mxu0 0
  %1454 = vmatpush1.bf16.msra.mxu0 0
  %1455 = vmatprep.subr.bf16.mxu0 0
  %1456 = vmatpush1.bf16.msra.mxu0 0
  %1457 = vmatprep.subr.bf16.mxu0 0
  %1458 = vmatpush1.bf16.msra.mxu0 0
  %1459 = vmatprep.subr.bf16.mxu0 0
  %1460 = vmatpush1.bf16.msra.mxu0 0
  %1461 = vmatprep.mubr.bf16.mxu0 %v1240
  %1462 = vmatmul.mubr.bf16.gmra.mrb[0].mxu0 %v20
  %v1463 = vpop.f32.mrb[0].mxu0
  %v1464 = vadd.f32 0.0, %v1463
  %v1465 = vpop.f32.mrb[0].mxu0
  %v1466 = vadd.f32 0.0, %v1465
  %v1467 = vpop.f32.mrb[0].mxu0
  %v1468 = vpop.f32.mrb[0].mxu0
  %1469 = vdwg.mxu0
  %1470 = vmatprep.subr.bf16.mxu0 %v848
  %1471 = vmatpush1.bf16.msra.mxu0 %v847
  %1472 = vmatprep.subr.bf16.mxu0 %v869
  %1473 = vmatpush1.bf16.msra.mxu0 %v868
  %1474 = vmatprep.subr.bf16.mxu0 %v890
  %1475 = vmatpush1.bf16.msra.mxu0 %v889
  %1476 = vmatprep.subr.bf16.mxu0 %v911
  %1477 = vmatpush1.bf16.msra.mxu0 %v910
  %1478 = vmatprep.subr.bf16.mxu0 %v932
  %1479 = vmatpush1.bf16.msra.mxu0 %v931
  %1480 = vmatprep.subr.bf16.mxu0 %v953
  %1481 = vmatpush1.bf16.msra.mxu0 %v952
  %1482 = vmatprep.subr.bf16.mxu0 %v974
  %1483 = vmatpush1.bf16.msra.mxu0 %v973
  %1484 = vmatprep.subr.bf16.mxu0 %v995
  %1485 = vmatpush1.bf16.msra.mxu0 %v994
  %1486 = vmatprep.subr.bf16.mxu0 %v1016
  %1487 = vmatpush1.bf16.msra.mxu0 %v1015
  %1488 = vmatprep.subr.bf16.mxu0 %v1271
  %1489 = vmatpush1.bf16.msra.mxu0 %v1268
  %1490 = vmatprep.subr.bf16.mxu0 0
  %1491 = vmatpush1.bf16.msra.mxu0 0
  %1492 = vmatprep.subr.bf16.mxu0 0
  %1493 = vmatpush1.bf16.msra.mxu0 0
  %1494 = vmatprep.subr.bf16.mxu0 0
  %1495 = vmatpush1.bf16.msra.mxu0 0
  %1496 = vmatprep.subr.bf16.mxu0 0
  %1497 = vmatpush1.bf16.msra.mxu0 0
  %1498 = vmatprep.subr.bf16.mxu0 0
  %1499 = vmatpush1.bf16.msra.mxu0 0
  %1500 = vmatprep.subr.bf16.mxu0 0
  %1501 = vmatpush1.bf16.msra.mxu0 0
  %1502 = vmatprep.mubr.bf16.mxu0 %v1240
  %1503 = vmatmul.mubr.bf16.gmra.mrb[0].mxu0 %v20
  %v1504 = vpop.f32.mrb[0].mxu0
  %v1505 = vadd.f32 0.0, %v1504
  %v1506 = vpop.f32.mrb[0].mxu0
  %v1507 = vadd.f32 0.0, %v1506
  %v1508 = vpop.f32.mrb[0].mxu0
  %v1509 = vpop.f32.mrb[0].mxu0
  %1510 = vdwg.mxu0
  %1511 = vmatprep.subr.bf16.mxu0 %v850
  %1512 = vmatpush1.bf16.msra.mxu0 %v849
  %1513 = vmatprep.subr.bf16.mxu0 %v871
  %1514 = vmatpush1.bf16.msra.mxu0 %v870
  %1515 = vmatprep.subr.bf16.mxu0 %v892
  %1516 = vmatpush1.bf16.msra.mxu0 %v891
  %1517 = vmatprep.subr.bf16.mxu0 %v913
  %1518 = vmatpush1.bf16.msra.mxu0 %v912
  %1519 = vmatprep.subr.bf16.mxu0 %v934
  %1520 = vmatpush1.bf16.msra.mxu0 %v933
  %1521 = vmatprep.subr.bf16.mxu0 %v955
  %1522 = vmatpush1.bf16.msra.mxu0 %v954
  %1523 = vmatprep.subr.bf16.mxu0 %v976
  %1524 = vmatpush1.bf16.msra.mxu0 %v975
  %1525 = vmatprep.subr.bf16.mxu0 %v997
  %1526 = vmatpush1.bf16.msra.mxu0 %v996
  %1527 = vmatprep.subr.bf16.mxu0 %v1018
  %1528 = vmatpush1.bf16.msra.mxu0 %v1017
  %1529 = vmatprep.subr.bf16.mxu0 %v1277
  %1530 = vmatpush1.bf16.msra.mxu0 %v1274
  %1531 = vmatprep.subr.bf16.mxu0 0
  %1532 = vmatpush1.bf16.msra.mxu0 0
  %1533 = vmatprep.subr.bf16.mxu0 0
  %1534 = vmatpush1.bf16.msra.mxu0 0
  %1535 = vmatprep.subr.bf16.mxu0 0
  %1536 = vmatpush1.bf16.msra.mxu0 0
  %1537 = vmatprep.subr.bf16.mxu0 0
  %1538 = vmatpush1.bf16.msra.mxu0 0
  %1539 = vmatprep.subr.bf16.mxu0 0
  %1540 = vmatpush1.bf16.msra.mxu0 0
  %1541 = vmatprep.subr.bf16.mxu0 0
  %1542 = vmatpush1.bf16.msra.mxu0 0
  %1543 = vmatprep.mubr.bf16.mxu0 %v1240
  %1544 = vmatmul.mubr.bf16.gmra.mrb[0].mxu0 %v20
  %v1545 = vpop.f32.mrb[0].mxu0
  %v1546 = vadd.f32 0.0, %v1545
  %v1547 = vpop.f32.mrb[0].mxu0
  %v1548 = vadd.f32 0.0, %v1547
  %v1549 = vpop.f32.mrb[0].mxu0
  %v1550 = vpop.f32.mrb[0].mxu0
  %1551 = vdwg.mxu0
  %1552 = vmatprep.subr.bf16.mxu0 %v852
  %1553 = vmatpush1.bf16.msra.mxu0 %v851
  %1554 = vmatprep.subr.bf16.mxu0 %v873
  %1555 = vmatpush1.bf16.msra.mxu0 %v872
  %1556 = vmatprep.subr.bf16.mxu0 %v894
  %1557 = vmatpush1.bf16.msra.mxu0 %v893
  %1558 = vmatprep.subr.bf16.mxu0 %v915
  %1559 = vmatpush1.bf16.msra.mxu0 %v914
  %1560 = vmatprep.subr.bf16.mxu0 %v936
  %1561 = vmatpush1.bf16.msra.mxu0 %v935
  %1562 = vmatprep.subr.bf16.mxu0 %v957
  %1563 = vmatpush1.bf16.msra.mxu0 %v956
  %1564 = vmatprep.subr.bf16.mxu0 %v978
  %1565 = vmatpush1.bf16.msra.mxu0 %v977
  %1566 = vmatprep.subr.bf16.mxu0 %v999
  %1567 = vmatpush1.bf16.msra.mxu0 %v998
  %1568 = vmatprep.subr.bf16.mxu0 %v1020
  %1569 = vmatpush1.bf16.msra.mxu0 %v1019
  %1570 = vmatprep.subr.bf16.mxu0 %v1283
  %1571 = vmatpush1.bf16.msra.mxu0 %v1280
  %1572 = vmatprep.subr.bf16.mxu0 0
  %1573 = vmatpush1.bf16.msra.mxu0 0
  %1574 = vmatprep.subr.bf16.mxu0 0
  %1575 = vmatpush1.bf16.msra.mxu0 0
  %1576 = vmatprep.subr.bf16.mxu0 0
  %1577 = vmatpush1.bf16.msra.mxu0 0
  %1578 = vmatprep.subr.bf16.mxu0 0
  %1579 = vmatpush1.bf16.msra.mxu0 0
  %1580 = vmatprep.subr.bf16.mxu0 0
  %1581 = vmatpush1.bf16.msra.mxu0 0
  %1582 = vmatprep.subr.bf16.mxu0 0
  %1583 = vmatpush1.bf16.msra.mxu0 0
  %1584 = vmatprep.mubr.bf16.mxu0 %v1240
  %1585 = vmatmul.mubr.bf16.gmra.mrb[0].mxu0 %v20
  %v1586 = vpop.f32.mrb[0].mxu0
  %v1587 = vadd.f32 0.0, %v1586
  %v1588 = vpop.f32.mrb[0].mxu0
  %v1589 = vadd.f32 0.0, %v1588
  %v1590 = vpop.f32.mrb[0].mxu0
  %v1591 = vpop.f32.mrb[0].mxu0
  %1592 = vdwg.mxu0
  %1593 = vmatprep.subr.bf16.mxu0 %v854
  %1594 = vmatpush1.bf16.msra.mxu0 %v853
  %1595 = vmatprep.subr.bf16.mxu0 %v875
  %1596 = vmatpush1.bf16.msra.mxu0 %v874
  %1597 = vmatprep.subr.bf16.mxu0 %v896
  %1598 = vmatpush1.bf16.msra.mxu0 %v895
  %1599 = vmatprep.subr.bf16.mxu0 %v917
  %1600 = vmatpush1.bf16.msra.mxu0 %v916
  %1601 = vmatprep.subr.bf16.mxu0 %v938
  %1602 = vmatpush1.bf16.msra.mxu0 %v937
  %1603 = vmatprep.subr.bf16.mxu0 %v959
  %1604 = vmatpush1.bf16.msra.mxu0 %v958
  %1605 = vmatprep.subr.bf16.mxu0 %v980
  %1606 = vmatpush1.bf16.msra.mxu0 %v979
  %1607 = vmatprep.subr.bf16.mxu0 %v1001
  %1608 = vmatpush1.bf16.msra.mxu0 %v1000
  %1609 = vmatprep.subr.bf16.mxu0 %v1022
  %1610 = vmatpush1.bf16.msra.mxu0 %v1021
  %1611 = vmatprep.subr.bf16.mxu0 %v1289
  %1612 = vmatpush1.bf16.msra.mxu0 %v1286
  %1613 = vmatprep.subr.bf16.mxu0 0
  %1614 = vmatpush1.bf16.msra.mxu0 0
  %1615 = vmatprep.subr.bf16.mxu0 0
  %1616 = vmatpush1.bf16.msra.mxu0 0
  %1617 = vmatprep.subr.bf16.mxu0 0
  %1618 = vmatpush1.bf16.msra.mxu0 0
  %1619 = vmatprep.subr.bf16.mxu0 0
  %1620 = vmatpush1.bf16.msra.mxu0 0
  %1621 = vmatprep.subr.bf16.mxu0 0
  %1622 = vmatpush1.bf16.msra.mxu0 0
  %1623 = vmatprep.subr.bf16.mxu0 0
  %1624 = vmatpush1.bf16.msra.mxu0 0
  %1625 = vmatprep.mubr.bf16.mxu0 %v1240
  %1626 = vmatmul.mubr.bf16.gmra.mrb[0].mxu0 %v20
  %v1627 = vpop.f32.mrb[0].mxu0
  %v1628 = vadd.f32 0.0, %v1627
  %v1629 = vpop.f32.mrb[0].mxu0
  %v1630 = vadd.f32 0.0, %v1629
  %v1631 = vpop.f32.mrb[0].mxu0
  %v1632 = vpop.f32.mrb[0].mxu0
  %1633 = vdwg.mxu0
  %1634 = vmatprep.subr.bf16.mxu0 %v856
  %1635 = vmatpush1.bf16.msra.mxu0 %v855
  %1636 = vmatprep.subr.bf16.mxu0 %v877
  %1637 = vmatpush1.bf16.msra.mxu0 %v876
  %1638 = vmatprep.subr.bf16.mxu0 %v898
  %1639 = vmatpush1.bf16.msra.mxu0 %v897
  %1640 = vmatprep.subr.bf16.mxu0 %v919
  %1641 = vmatpush1.bf16.msra.mxu0 %v918
  %1642 = vmatprep.subr.bf16.mxu0 %v940
  %1643 = vmatpush1.bf16.msra.mxu0 %v939
  %1644 = vmatprep.subr.bf16.mxu0 %v961
  %1645 = vmatpush1.bf16.msra.mxu0 %v960
  %1646 = vmatprep.subr.bf16.mxu0 %v982
  %1647 = vmatpush1.bf16.msra.mxu0 %v981
  %1648 = vmatprep.subr.bf16.mxu0 %v1003
  %1649 = vmatpush1.bf16.msra.mxu0 %v1002
  %1650 = vmatprep.subr.bf16.mxu0 %v1024
  %1651 = vmatpush1.bf16.msra.mxu0 %v1023
  %1652 = vmatprep.subr.bf16.mxu0 %v1295
  %1653 = vmatpush1.bf16.msra.mxu0 %v1292
  %1654 = vmatprep.subr.bf16.mxu0 0
  %1655 = vmatpush1.bf16.msra.mxu0 0
  %1656 = vmatprep.subr.bf16.mxu0 0
  %1657 = vmatpush1.bf16.msra.mxu0 0
  %1658 = vmatprep.subr.bf16.mxu0 0
  %1659 = vmatpush1.bf16.msra.mxu0 0
  %1660 = vmatprep.subr.bf16.mxu0 0
  %1661 = vmatpush1.bf16.msra.mxu0 0
  %1662 = vmatprep.subr.bf16.mxu0 0
  %1663 = vmatpush1.bf16.msra.mxu0 0
  %1664 = vmatprep.subr.bf16.mxu0 0
  %1665 = vmatpush1.bf16.msra.mxu0 0
  %1666 = vmatprep.mubr.bf16.mxu0 %v1240
  %1667 = vmatmul.mubr.bf16.gmra.mrb[0].mxu0 %v20
  %v1668 = vpop.f32.mrb[0].mxu0
  %v1669 = vadd.f32 0.0, %v1668
  %v1670 = vpop.f32.mrb[0].mxu0
  %v1671 = vadd.f32 0.0, %v1670
  %v1672 = vpop.f32.mrb[0].mxu0
  %v1673 = vpop.f32.mrb[0].mxu0
  %1674 = vdwg.mxu0
  %1675 = vmatprep.subr.bf16.mxu0 %v858
  %1676 = vmatpush1.bf16.msra.mxu0 %v857
  %1677 = vmatprep.subr.bf16.mxu0 %v879
  %1678 = vmatpush1.bf16.msra.mxu0 %v878
  %1679 = vmatprep.subr.bf16.mxu0 %v900
  %1680 = vmatpush1.bf16.msra.mxu0 %v899
  %1681 = vmatprep.subr.bf16.mxu0 %v921
  %1682 = vmatpush1.bf16.msra.mxu0 %v920
  %1683 = vmatprep.subr.bf16.mxu0 %v942
  %1684 = vmatpush1.bf16.msra.mxu0 %v941
  %1685 = vmatprep.subr.bf16.mxu0 %v963
  %1686 = vmatpush1.bf16.msra.mxu0 %v962
  %1687 = vmatprep.subr.bf16.mxu0 %v984
  %1688 = vmatpush1.bf16.msra.mxu0 %v983
  %1689 = vmatprep.subr.bf16.mxu0 %v1005
  %1690 = vmatpush1.bf16.msra.mxu0 %v1004
  %1691 = vmatprep.subr.bf16.mxu0 %v1026
  %1692 = vmatpush1.bf16.msra.mxu0 %v1025
  %1693 = vmatprep.subr.bf16.mxu0 %v1301
  %1694 = vmatpush1.bf16.msra.mxu0 %v1298
  %1695 = vmatprep.subr.bf16.mxu0 0
  %1696 = vmatpush1.bf16.msra.mxu0 0
  %1697 = vmatprep.subr.bf16.mxu0 0
  %1698 = vmatpush1.bf16.msra.mxu0 0
  %1699 = vmatprep.subr.bf16.mxu0 0
  %1700 = vmatpush1.bf16.msra.mxu0 0
  %1701 = vmatprep.subr.bf16.mxu0 0
  %1702 = vmatpush1.bf16.msra.mxu0 0
  %1703 = vmatprep.subr.bf16.mxu0 0
  %1704 = vmatpush1.bf16.msra.mxu0 0
  %1705 = vmatprep.subr.bf16.mxu0 0
  %1706 = vmatpush1.bf16.msra.mxu0 0
  %1707 = vmatprep.mubr.bf16.mxu0 %v1240
  %1708 = vmatmul.mubr.bf16.gmra.mrb[0].mxu0 %v20
  %v1709 = vpop.f32.mrb[0].mxu0
  %v1710 = vadd.f32 0.0, %v1709
  %v1711 = vpop.f32.mrb[0].mxu0
  %v1712 = vadd.f32 0.0, %v1711
  %v1713 = vpop.f32.mrb[0].mxu0
  %v1714 = vpop.f32.mrb[0].mxu0
  %1715 = vdwg.mxu0
  %1716 = vmatprep.subr.bf16.mxu0 0
  %1717 = vmatpush1.bf16.msra.mxu0 %v859
  %1718 = vmatprep.subr.bf16.mxu0 0
  %1719 = vmatpush1.bf16.msra.mxu0 %v880
  %1720 = vmatprep.subr.bf16.mxu0 0
  %1721 = vmatpush1.bf16.msra.mxu0 %v901
  %1722 = vmatprep.subr.bf16.mxu0 0
  %1723 = vmatpush1.bf16.msra.mxu0 %v922
  %1724 = vmatprep.subr.bf16.mxu0 0
  %1725 = vmatpush1.bf16.msra.mxu0 %v943
  %1726 = vmatprep.subr.bf16.mxu0 0
  %1727 = vmatpush1.bf16.msra.mxu0 %v964
  %1728 = vmatprep.subr.bf16.mxu0 0
  %1729 = vmatpush1.bf16.msra.mxu0 %v985
  %1730 = vmatprep.subr.bf16.mxu0 0
  %1731 = vmatpush1.bf16.msra.mxu0 %v1006
  %1732 = vmatprep.subr.bf16.mxu0 0
  %1733 = vmatpush1.bf16.msra.mxu0 %v1027
  %1734 = vmatprep.subr.bf16.mxu0 0
  %1735 = vmatpush1.bf16.msra.mxu0 %v1304
  %1736 = vmatprep.subr.bf16.mxu0 0
  %1737 = vmatpush1.bf16.msra.mxu0 0
  %1738 = vmatprep.subr.bf16.mxu0 0
  %1739 = vmatpush1.bf16.msra.mxu0 0
  %1740 = vmatprep.subr.bf16.mxu0 0
  %1741 = vmatpush1.bf16.msra.mxu0 0
  %1742 = vmatprep.subr.bf16.mxu0 0
  %1743 = vmatpush1.bf16.msra.mxu0 0
  %1744 = vmatprep.subr.bf16.mxu0 0
  %1745 = vmatpush1.bf16.msra.mxu0 0
  %1746 = vmatprep.subr.bf16.mxu0 0
  %1747 = vmatpush1.bf16.msra.mxu0 0
  %1748 = vmatprep.mubr.bf16.mxu0 %v1240
  %1749 = vmatmul.mubr.bf16.gmra.mrb[0].mxu0 %v20
  %v1750 = vpop.f32.mrb[0].mxu0
  %v1751 = vadd.f32 0.0, %v1750
  %v1752 = vpop.f32.mrb[0].mxu0
  %v1753 = vpop.f32.mrb[0].mxu0
  %v1754 = vpop.f32.mrb[0].mxu0
  %1755 = vdwg.mxu0
  %1756 = vst [vmem:[#allocation2] sm:$0xff] %v1341
  %1757 = vst [vmem:[#allocation2 + $0x8] sm:$0xff] %v1343
  %1758 = vst [vmem:[#allocation2 + $0x10] sm:$0xff] %v1382
  %1759 = vst [vmem:[#allocation2 + $0x18] sm:$0xff] %v1384
  %1760 = vst [vmem:[#allocation2 + $0x20] sm:$0xff] %v1423
  %1761 = vst [vmem:[#allocation2 + $0x28] sm:$0xff] %v1425
  %1762 = vst [vmem:[#allocation2 + $0x30] sm:$0xff] %v1464
  %1763 = vst [vmem:[#allocation2 + $0x38] sm:$0xff] %v1466
  %1764 = vst [vmem:[#allocation2 + $0x40] sm:$0xff] %v1505
  %1765 = vst [vmem:[#allocation2 + $0x48] sm:$0xff] %v1507
  %1766 = vst [vmem:[#allocation2 + $0x50] sm:$0xff] %v1546
  %1767 = vst [vmem:[#allocation2 + $0x58] sm:$0xff] %v1548
  %1768 = vst [vmem:[#allocation2 + $0x60] sm:$0xff] %v1587
  %1769 = vst [vmem:[#allocation2 + $0x68] sm:$0xff] %v1589
  %1770 = vst [vmem:[#allocation2 + $0x70] sm:$0xff] %v1628
  %1771 = vst [vmem:[#allocation2 + $0x78] sm:$0xff] %v1630
  %1772 = vst [vmem:[#allocation2 + $0x80] sm:$0xff] %v1669
  %1773 = vst [vmem:[#allocation2 + $0x88] sm:$0xff] %v1671
  %1774 = vst [vmem:[#allocation2 + $0x90] sm:$0xff] %v1710
  %1775 = vst [vmem:[#allocation2 + $0x98] sm:$0xff] %v1712
  %1776 = vst [vmem:[#allocation2 + $0xa0] sm:$0xff] %v1751
  %v1777 = vld [vmem:[%s3] sm:$0xff]
  %v1778 = vld [vmem:[%s3 + $0x8] sm:$0xff]
  %v1779 = vld [vmem:[%s3 + $0x10] sm:$0xff]
  %v1780 = vld [vmem:[%s3 + $0x18] sm:$0xf]
  %v1781 = vld [vmem:[%s3 + $0x1c] sm:$0xff]
  %v1782 = vld [vmem:[%s3 + $0x24] sm:$0xff]
  %v1783 = vld [vmem:[%s3 + $0x2c] sm:$0xff]
  %v1784 = vld [vmem:[%s3 + $0x34] sm:$0xf]
  %v1785 = vld [vmem:[#allocation2] sm:$0xff]
  %v1786 = vld [vmem:[#allocation2 + $0x8] sm:$0xff]
  %v1787 = vld [vmem:[#allocation2 + $0x10] sm:$0xff]
  %v1788 = vld [vmem:[#allocation2 + $0x18] sm:$0xff]
  %v1789 = vld [vmem:[#allocation2 + $0x20] sm:$0xff]
  %v1790 = vld [vmem:[#allocation2 + $0x28] sm:$0xff]
  %v1791 = vld [vmem:[#allocation2 + $0x30] sm:$0xff]
  %v1792 = vld [vmem:[#allocation2 + $0x38] sm:$0xff]
  %v1793 = vld [vmem:[#allocation2 + $0x40] sm:$0xff]
  %v1794 = vld [vmem:[#allocation2 + $0x48] sm:$0xff]
  %v1795 = vld [vmem:[#allocation2 + $0x50] sm:$0xff]
  %v1796 = vld [vmem:[#allocation2 + $0x58] sm:$0xff]
  %v1797 = vld [vmem:[#allocation2 + $0x60] sm:$0xff]
  %v1798 = vld [vmem:[#allocation2 + $0x68] sm:$0xff]
  %v1799 = vld [vmem:[#allocation2 + $0x70] sm:$0xff]
  %v1800 = vld [vmem:[#allocation2 + $0x78] sm:$0xff]
  %v1801 = vld [vmem:[#allocation2 + $0x80] sm:$0xff]
  %v1802 = vld [vmem:[#allocation2 + $0x88] sm:$0xff]
  %v1803 = vld [vmem:[#allocation2 + $0x90] sm:$0xff]
  %v1804 = vld [vmem:[#allocation2 + $0x98] sm:$0xff]
  %v1805 = vld [vmem:[#allocation2 + $0xa0] sm:$0xff]
  %v1806 = vld [vmem:[%s2] sm:$0xff]
  %v1807 = vld [vmem:[%s2 + $0x8] sm:$0xff]
  %v1808 = vld [vmem:[%s2 + $0x10] sm:$0xff]
  %v1809 = vld [vmem:[%s2 + $0x18] sm:$0xff]
  %v1810 = vpack.c.bf16 %v1807, %v1806
  %v1811 = vpack.c.bf16 %v1809, %v1808
  %v1820 = vunpack.c.l.b16 %v1777
  %v1821 = vunpack.c.h.b16 %v1777
  %v1822 = vunpack.c.l.b16 %v1778
  %v1823 = vunpack.c.h.b16 %v1778
  %v1824 = vunpack.c.l.b16 %v1779
  %v1825 = vunpack.c.h.b16 %v1779
  %v1826 = vunpack.c.l.b16 %v1780
  %v1827 = vunpack.c.l.b16 %v1781
  %v1828 = vunpack.c.h.b16 %v1781
  %v1829 = vunpack.c.l.b16 %v1782
  %v1830 = vunpack.c.h.b16 %v1782
  %v1831 = vunpack.c.l.b16 %v1783
  %v1832 = vunpack.c.h.b16 %v1783
  %v1833 = vunpack.c.l.b16 %v1784
  %v1834 = vpack.c.b16 %v1827, %v1820
  %v1835 = vpack.c.b16 %v1828, %v1821
  %v1836 = vpack.c.b16 %v1829, %v1822
  %v1837 = vpack.c.b16 %v1830, %v1823
  %v1838 = vpack.c.b16 %v1831, %v1824
  %v1839 = vpack.c.b16 %v1832, %v1825
  %v1840 = vpack.c.b16 %v1833, %v1826
  %vm1848 = vcmask 130048
  %v1850 = vsel %vm1848, %v1810, 0
  %v1853 = vsel %vm1848, %v1811, 0
  %1855 = vmatprep.subr.bf16.mxu0 %v1835
  %1856 = vmatpush1.bf16.msra.mxu0 %v1834
  %1857 = vmatprep.subr.bf16.mxu0 0
  %1858 = vmatpush1.bf16.msra.mxu0 0
  %1859 = vmatprep.subr.bf16.mxu0 0
  %1860 = vmatpush1.bf16.msra.mxu0 0
  %1861 = vmatprep.subr.bf16.mxu0 0
  %1862 = vmatpush1.bf16.msra.mxu0 0
  %1863 = vmatprep.subr.bf16.mxu0 0
  %1864 = vmatpush1.bf16.msra.mxu0 0
  %1865 = vmatprep.subr.bf16.mxu0 0
  %1866 = vmatpush1.bf16.msra.mxu0 0
  %1867 = vmatprep.subr.bf16.mxu0 0
  %1868 = vmatpush1.bf16.msra.mxu0 0
  %1869 = vmatprep.subr.bf16.mxu0 0
  %1870 = vmatpush1.bf16.msra.mxu0 0
  %1871 = vmatprep.subr.bf16.mxu0 0
  %1872 = vmatpush1.bf16.msra.mxu0 0
  %1873 = vmatprep.subr.bf16.mxu0 0
  %1874 = vmatpush1.bf16.msra.mxu0 0
  %1875 = vmatprep.subr.bf16.mxu0 0
  %1876 = vmatpush1.bf16.msra.mxu0 0
  %1877 = vmatprep.subr.bf16.mxu0 0
  %1878 = vmatpush1.bf16.msra.mxu0 0
  %1879 = vmatprep.subr.bf16.mxu0 0
  %1880 = vmatpush1.bf16.msra.mxu0 0
  %1881 = vmatprep.subr.bf16.mxu0 0
  %1882 = vmatpush1.bf16.msra.mxu0 0
  %1883 = vmatprep.subr.bf16.mxu0 0
  %1884 = vmatpush1.bf16.msra.mxu0 0
  %1885 = vmatprep.subr.bf16.mxu0 0
  %1886 = vmatpush1.bf16.msra.mxu0 0
  %1887 = vmatprep.mubr.bf16.mxu0 0
  %1888 = vmatmul.mubr.bf16.gmra.mrb[0].mxu0 %v1850
  %v1889 = vpop.f32.mrb[0].mxu0
  %v1890 = vadd.f32 0.0, %v1889
  %v1891 = vpop.f32.mrb[0].mxu0
  %v1892 = vadd.f32 0.0, %v1891
  %v1893 = vpop.f32.mrb[0].mxu0
  %v1894 = vadd.f32 0.0, %v1893
  %v1895 = vpop.f32.mrb[0].mxu0
  %v1896 = vadd.f32 0.0, %v1895
  %1897 = vmatprep.mubr.bf16.mxu0 0
  %1898 = vmatmul.mubr.bf16.gmra.mrb[0].mxu0 %v1853
  %v1899 = vpop.f32.mrb[0].mxu0
  %v1900 = vadd.f32 0.0, %v1899
  %v1901 = vpop.f32.mrb[0].mxu0
  %v1902 = vadd.f32 0.0, %v1901
  %v1903 = vpop.f32.mrb[0].mxu0
  %v1904 = vadd.f32 0.0, %v1903
  %v1905 = vpop.f32.mrb[0].mxu0
  %v1906 = vadd.f32 0.0, %v1905
  %1907 = vdwg.mxu0
  %1908 = vmatprep.subr.bf16.mxu0 %v1837
  %1909 = vmatpush1.bf16.msra.mxu0 %v1836
  %1910 = vmatprep.subr.bf16.mxu0 0
  %1911 = vmatpush1.bf16.msra.mxu0 0
  %1912 = vmatprep.subr.bf16.mxu0 0
  %1913 = vmatpush1.bf16.msra.mxu0 0
  %1914 = vmatprep.subr.bf16.mxu0 0
  %1915 = vmatpush1.bf16.msra.mxu0 0
  %1916 = vmatprep.subr.bf16.mxu0 0
  %1917 = vmatpush1.bf16.msra.mxu0 0
  %1918 = vmatprep.subr.bf16.mxu0 0
  %1919 = vmatpush1.bf16.msra.mxu0 0
  %1920 = vmatprep.subr.bf16.mxu0 0
  %1921 = vmatpush1.bf16.msra.mxu0 0
  %1922 = vmatprep.subr.bf16.mxu0 0
  %1923 = vmatpush1.bf16.msra.mxu0 0
  %1924 = vmatprep.subr.bf16.mxu0 0
  %1925 = vmatpush1.bf16.msra.mxu0 0
  %1926 = vmatprep.subr.bf16.mxu0 0
  %1927 = vmatpush1.bf16.msra.mxu0 0
  %1928 = vmatprep.subr.bf16.mxu0 0
  %1929 = vmatpush1.bf16.msra.mxu0 0
  %1930 = vmatprep.subr.bf16.mxu0 0
  %1931 = vmatpush1.bf16.msra.mxu0 0
  %1932 = vmatprep.subr.bf16.mxu0 0
  %1933 = vmatpush1.bf16.msra.mxu0 0
  %1934 = vmatprep.subr.bf16.mxu0 0
  %1935 = vmatpush1.bf16.msra.mxu0 0
  %1936 = vmatprep.subr.bf16.mxu0 0
  %1937 = vmatpush1.bf16.msra.mxu0 0
  %1938 = vmatprep.subr.bf16.mxu0 0
  %1939 = vmatpush1.bf16.msra.mxu0 0
  %1940 = vmatprep.mubr.bf16.mxu0 0
  %1941 = vmatmul.mubr.bf16.gmra.mrb[0].mxu0 %v1850
  %v1942 = vpop.f32.mrb[0].mxu0
  %v1943 = vadd.f32 0.0, %v1942
  %v1944 = vpop.f32.mrb[0].mxu0
  %v1945 = vadd.f32 0.0, %v1944
  %v1946 = vpop.f32.mrb[0].mxu0
  %v1947 = vadd.f32 0.0, %v1946
  %v1948 = vpop.f32.mrb[0].mxu0
  %v1949 = vadd.f32 0.0, %v1948
  %1950 = vmatprep.mubr.bf16.mxu0 0
  %1951 = vmatmul.mubr.bf16.gmra.mrb[0].mxu0 %v1853
  %v1952 = vpop.f32.mrb[0].mxu0
  %v1953 = vadd.f32 0.0, %v1952
  %v1954 = vpop.f32.mrb[0].mxu0
  %v1955 = vadd.f32 0.0, %v1954
  %v1956 = vpop.f32.mrb[0].mxu0
  %v1957 = vadd.f32 0.0, %v1956
  %v1958 = vpop.f32.mrb[0].mxu0
  %v1959 = vadd.f32 0.0, %v1958
  %1960 = vdwg.mxu0
  %1961 = vmatprep.subr.bf16.mxu0 %v1839
  %1962 = vmatpush1.bf16.msra.mxu0 %v1838
  %1963 = vmatprep.subr.bf16.mxu0 0
  %1964 = vmatpush1.bf16.msra.mxu0 0
  %1965 = vmatprep.subr.bf16.mxu0 0
  %1966 = vmatpush1.bf16.msra.mxu0 0
  %1967 = vmatprep.subr.bf16.mxu0 0
  %1968 = vmatpush1.bf16.msra.mxu0 0
  %1969 = vmatprep.subr.bf16.mxu0 0
  %1970 = vmatpush1.bf16.msra.mxu0 0
  %1971 = vmatprep.subr.bf16.mxu0 0
  %1972 = vmatpush1.bf16.msra.mxu0 0
  %1973 = vmatprep.subr.bf16.mxu0 0
  %1974 = vmatpush1.bf16.msra.mxu0 0
  %1975 = vmatprep.subr.bf16.mxu0 0
  %1976 = vmatpush1.bf16.msra.mxu0 0
  %1977 = vmatprep.subr.bf16.mxu0 0
  %1978 = vmatpush1.bf16.msra.mxu0 0
  %1979 = vmatprep.subr.bf16.mxu0 0
  %1980 = vmatpush1.bf16.msra.mxu0 0
  %1981 = vmatprep.subr.bf16.mxu0 0
  %1982 = vmatpush1.bf16.msra.mxu0 0
  %1983 = vmatprep.subr.bf16.mxu0 0
  %1984 = vmatpush1.bf16.msra.mxu0 0
  %1985 = vmatprep.subr.bf16.mxu0 0
  %1986 = vmatpush1.bf16.msra.mxu0 0
  %1987 = vmatprep.subr.bf16.mxu0 0
  %1988 = vmatpush1.bf16.msra.mxu0 0
  %1989 = vmatprep.subr.bf16.mxu0 0
  %1990 = vmatpush1.bf16.msra.mxu0 0
  %1991 = vmatprep.subr.bf16.mxu0 0
  %1992 = vmatpush1.bf16.msra.mxu0 0
  %1993 = vmatprep.mubr.bf16.mxu0 0
  %1994 = vmatmul.mubr.bf16.gmra.mrb[0].mxu0 %v1850
  %v1995 = vpop.f32.mrb[0].mxu0
  %v1996 = vadd.f32 0.0, %v1995
  %v1997 = vpop.f32.mrb[0].mxu0
  %v1998 = vadd.f32 0.0, %v1997
  %v1999 = vpop.f32.mrb[0].mxu0
  %v2000 = vadd.f32 0.0, %v1999
  %v2001 = vpop.f32.mrb[0].mxu0
  %v2002 = vadd.f32 0.0, %v2001
  %2003 = vmatprep.mubr.bf16.mxu0 0
  %2004 = vmatmul.mubr.bf16.gmra.mrb[0].mxu0 %v1853
  %v2005 = vpop.f32.mrb[0].mxu0
  %v2006 = vadd.f32 0.0, %v2005
  %v2007 = vpop.f32.mrb[0].mxu0
  %v2008 = vadd.f32 0.0, %v2007
  %v2009 = vpop.f32.mrb[0].mxu0
  %v2010 = vadd.f32 0.0, %v2009
  %v2011 = vpop.f32.mrb[0].mxu0
  %v2012 = vadd.f32 0.0, %v2011
  %2013 = vdwg.mxu0
  %2014 = vmatprep.subr.bf16.mxu0 0
  %2015 = vmatpush1.bf16.msra.mxu0 %v1840
  %2016 = vmatprep.subr.bf16.mxu0 0
  %2017 = vmatpush1.bf16.msra.mxu0 0
  %2018 = vmatprep.subr.bf16.mxu0 0
  %2019 = vmatpush1.bf16.msra.mxu0 0
  %2020 = vmatprep.subr.bf16.mxu0 0
  %2021 = vmatpush1.bf16.msra.mxu0 0
  %2022 = vmatprep.subr.bf16.mxu0 0
  %2023 = vmatpush1.bf16.msra.mxu0 0
  %2024 = vmatprep.subr.bf16.mxu0 0
  %2025 = vmatpush1.bf16.msra.mxu0 0
  %2026 = vmatprep.subr.bf16.mxu0 0
  %2027 = vmatpush1.bf16.msra.mxu0 0
  %2028 = vmatprep.subr.bf16.mxu0 0
  %2029 = vmatpush1.bf16.msra.mxu0 0
  %2030 = vmatprep.subr.bf16.mxu0 0
  %2031 = vmatpush1.bf16.msra.mxu0 0
  %2032 = vmatprep.subr.bf16.mxu0 0
  %2033 = vmatpush1.bf16.msra.mxu0 0
  %2034 = vmatprep.subr.bf16.mxu0 0
  %2035 = vmatpush1.bf16.msra.mxu0 0
  %2036 = vmatprep.subr.bf16.mxu0 0
  %2037 = vmatpush1.bf16.msra.mxu0 0
  %2038 = vmatprep.subr.bf16.mxu0 0
  %2039 = vmatpush1.bf16.msra.mxu0 0
  %2040 = vmatprep.subr.bf16.mxu0 0
  %2041 = vmatpush1.bf16.msra.mxu0 0
  %2042 = vmatprep.subr.bf16.mxu0 0
  %2043 = vmatpush1.bf16.msra.mxu0 0
  %2044 = vmatprep.subr.bf16.mxu0 0
  %2045 = vmatpush1.bf16.msra.mxu0 0
  %2046 = vmatprep.mubr.bf16.mxu0 0
  %2047 = vmatmul.mubr.bf16.gmra.mrb[0].mxu0 %v1850
  %v2048 = vpop.f32.mrb[0].mxu0
  %v2049 = vadd.f32 0.0, %v2048
  %v2050 = vpop.f32.mrb[0].mxu0
  %v2051 = vpop.f32.mrb[0].mxu0
  %v2052 = vadd.f32 0.0, %v2051
  %v2053 = vpop.f32.mrb[0].mxu0
  %2054 = vmatprep.mubr.bf16.mxu0 0
  %2055 = vmatmul.mubr.bf16.gmra.mrb[0].mxu0 %v1853
  %v2056 = vpop.f32.mrb[0].mxu0
  %v2057 = vadd.f32 0.0, %v2056
  %v2058 = vpop.f32.mrb[0].mxu0
  %v2059 = vpop.f32.mrb[0].mxu0
  %v2060 = vadd.f32 0.0, %v2059
  %v2061 = vpop.f32.mrb[0].mxu0
  %2062 = vdwg.mxu0
  %v2063 = vmul.f32 %v1890, %v1785
  %v2064 = vmul.f32 %v1892, %v1786
  %v2065 = vmul.f32 %v1943, %v1787
  %v2066 = vmul.f32 %v1945, %v1788
  %v2067 = vmul.f32 %v1996, %v1789
  %v2068 = vmul.f32 %v1998, %v1790
  %v2069 = vmul.f32 %v2049, %v1791
  %v2070 = vmul.f32 %v1894, %v1792
  %v2071 = vmul.f32 %v1896, %v1793
  %v2072 = vmul.f32 %v1947, %v1794
  %v2073 = vmul.f32 %v1949, %v1795
  %v2074 = vmul.f32 %v2000, %v1796
  %v2075 = vmul.f32 %v2002, %v1797
  %v2076 = vmul.f32 %v2052, %v1798
  %v2077 = vadd.f32 %v2063, %v2070
  %v2078 = vadd.f32 %v2064, %v2071
  %v2079 = vadd.f32 %v2065, %v2072
  %v2080 = vadd.f32 %v2066, %v2073
  %v2081 = vadd.f32 %v2067, %v2074
  %v2082 = vadd.f32 %v2068, %v2075
  %v2083 = vadd.f32 %v2069, %v2076
  %v2084 = vmul.f32 %v1900, %v1799
  %v2085 = vmul.f32 %v1902, %v1800
  %v2086 = vmul.f32 %v1953, %v1801
  %v2087 = vmul.f32 %v1955, %v1802
  %v2088 = vmul.f32 %v2006, %v1803
  %v2089 = vmul.f32 %v2008, %v1804
  %v2090 = vmul.f32 %v2057, %v1805
  %v2091 = vadd.f32 %v2077, %v2084
  %v2092 = vadd.f32 %v2078, %v2085
  %v2093 = vadd.f32 %v2079, %v2086
  %v2094 = vadd.f32 %v2080, %v2087
  %v2095 = vadd.f32 %v2081, %v2088
  %v2096 = vadd.f32 %v2082, %v2089
  %v2097 = vadd.f32 %v2083, %v2090
  %v2098 = vadd.f32 %v2091, %v1904
  %v2099 = vadd.f32 %v2092, %v1906
  %v2100 = vadd.f32 %v2093, %v1957
  %v2101 = vadd.f32 %v2094, %v1959
  %v2102 = vadd.f32 %v2095, %v2010
  %v2103 = vadd.f32 %v2096, %v2012
  %v2104 = vadd.f32 %v2097, %v2060
  %2105 = vst [vmem:[%s4] sm:$0xff] %v2098
  %2106 = vst [vmem:[%s4 + $0x8] sm:$0xff] %v2099
  %2107 = vst [vmem:[%s4 + $0x10] sm:$0xff] %v2100
  %2108 = vst [vmem:[%s4 + $0x18] sm:$0xff] %v2101
  %2109 = vst [vmem:[%s4 + $0x20] sm:$0xff] %v2102
  %2110 = vst [vmem:[%s4 + $0x28] sm:$0xff] %v2103
  %2111 = vst [vmem:[%s4 + $0x30] sm:$0xff] %v2104
  %v2112 = vld [vmem:[%s2 + $0x20] sm:$0xff]
  %v2113 = vld [vmem:[%s2 + $0x28] sm:$0xff]
  %v2114 = vld [vmem:[%s2 + $0x30] sm:$0xff]
  %v2115 = vld [vmem:[%s2 + $0x38] sm:$0xff]
  %v2116 = vpack.c.bf16 %v2113, %v2112
  %v2117 = vpack.c.bf16 %v2115, %v2114
  %v2119 = vsel %vm1848, %v2116, 0
  %v2122 = vsel %vm1848, %v2117, 0
  %2124 = vmatprep.subr.bf16.mxu0 %v1835
  %2125 = vmatpush1.bf16.msra.mxu0 %v1834
  %2126 = vmatprep.subr.bf16.mxu0 0
  %2127 = vmatpush1.bf16.msra.mxu0 0
  %2128 = vmatprep.subr.bf16.mxu0 0
  %2129 = vmatpush1.bf16.msra.mxu0 0
  %2130 = vmatprep.subr.bf16.mxu0 0
  %2131 = vmatpush1.bf16.msra.mxu0 0
  %2132 = vmatprep.subr.bf16.mxu0 0
  %2133 = vmatpush1.bf16.msra.mxu0 0
  %2134 = vmatprep.subr.bf16.mxu0 0
  %2135 = vmatpush1.bf16.msra.mxu0 0
  %2136 = vmatprep.subr.bf16.mxu0 0
  %2137 = vmatpush1.bf16.msra.mxu0 0
  %2138 = vmatprep.subr.bf16.mxu0 0
  %2139 = vmatpush1.bf16.msra.mxu0 0
  %2140 = vmatprep.subr.bf16.mxu0 0
  %2141 = vmatpush1.bf16.msra.mxu0 0
  %2142 = vmatprep.subr.bf16.mxu0 0
  %2143 = vmatpush1.bf16.msra.mxu0 0
  %2144 = vmatprep.subr.bf16.mxu0 0
  %2145 = vmatpush1.bf16.msra.mxu0 0
  %2146 = vmatprep.subr.bf16.mxu0 0
  %2147 = vmatpush1.bf16.msra.mxu0 0
  %2148 = vmatprep.subr.bf16.mxu0 0
  %2149 = vmatpush1.bf16.msra.mxu0 0
  %2150 = vmatprep.subr.bf16.mxu0 0
  %2151 = vmatpush1.bf16.msra.mxu0 0
  %2152 = vmatprep.subr.bf16.mxu0 0
  %2153 = vmatpush1.bf16.msra.mxu0 0
  %2154 = vmatprep.subr.bf16.mxu0 0
  %2155 = vmatpush1.bf16.msra.mxu0 0
  %2156 = vmatprep.mubr.bf16.mxu0 0
  %2157 = vmatmul.mubr.bf16.gmra.mrb[0].mxu0 %v2119
  %v2158 = vpop.f32.mrb[0].mxu0
  %v2159 = vadd.f32 0.0, %v2158
  %v2160 = vpop.f32.mrb[0].mxu0
  %v2161 = vadd.f32 0.0, %v2160
  %v2162 = vpop.f32.mrb[0].mxu0
  %v2163 = vadd.f32 0.0, %v2162
  %v2164 = vpop.f32.mrb[0].mxu0
  %v2165 = vadd.f32 0.0, %v2164
  %2166 = vmatprep.mubr.bf16.mxu0 0
  %2167 = vmatmul.mubr.bf16.gmra.mrb[0].mxu0 %v2122
  %v2168 = vpop.f32.mrb[0].mxu0
  %v2169 = vadd.f32 0.0, %v2168
  %v2170 = vpop.f32.mrb[0].mxu0
  %v2171 = vadd.f32 0.0, %v2170
  %v2172 = vpop.f32.mrb[0].mxu0
  %v2173 = vadd.f32 0.0, %v2172
  %v2174 = vpop.f32.mrb[0].mxu0
  %v2175 = vadd.f32 0.0, %v2174
  %2176 = vdwg.mxu0
  %2177 = vmatprep.subr.bf16.mxu0 %v1837
  %2178 = vmatpush1.bf16.msra.mxu0 %v1836
  %2179 = vmatprep.subr.bf16.mxu0 0
  %2180 = vmatpush1.bf16.msra.mxu0 0
  %2181 = vmatprep.subr.bf16.mxu0 0
  %2182 = vmatpush1.bf16.msra.mxu0 0
  %2183 = vmatprep.subr.bf16.mxu0 0
  %2184 = vmatpush1.bf16.msra.mxu0 0
  %2185 = vmatprep.subr.bf16.mxu0 0
  %2186 = vmatpush1.bf16.msra.mxu0 0
  %2187 = vmatprep.subr.bf16.mxu0 0
  %2188 = vmatpush1.bf16.msra.mxu0 0
  %2189 = vmatprep.subr.bf16.mxu0 0
  %2190 = vmatpush1.bf16.msra.mxu0 0
  %2191 = vmatprep.subr.bf16.mxu0 0
  %2192 = vmatpush1.bf16.msra.mxu0 0
  %2193 = vmatprep.subr.bf16.mxu0 0
  %2194 = vmatpush1.bf16.msra.mxu0 0
  %2195 = vmatprep.subr.bf16.mxu0 0
  %2196 = vmatpush1.bf16.msra.mxu0 0
  %2197 = vmatprep.subr.bf16.mxu0 0
  %2198 = vmatpush1.bf16.msra.mxu0 0
  %2199 = vmatprep.subr.bf16.mxu0 0
  %2200 = vmatpush1.bf16.msra.mxu0 0
  %2201 = vmatprep.subr.bf16.mxu0 0
  %2202 = vmatpush1.bf16.msra.mxu0 0
  %2203 = vmatprep.subr.bf16.mxu0 0
  %2204 = vmatpush1.bf16.msra.mxu0 0
  %2205 = vmatprep.subr.bf16.mxu0 0
  %2206 = vmatpush1.bf16.msra.mxu0 0
  %2207 = vmatprep.subr.bf16.mxu0 0
  %2208 = vmatpush1.bf16.msra.mxu0 0
  %2209 = vmatprep.mubr.bf16.mxu0 0
  %2210 = vmatmul.mubr.bf16.gmra.mrb[0].mxu0 %v2119
  %v2211 = vpop.f32.mrb[0].mxu0
  %v2212 = vadd.f32 0.0, %v2211
  %v2213 = vpop.f32.mrb[0].mxu0
  %v2214 = vadd.f32 0.0, %v2213
  %v2215 = vpop.f32.mrb[0].mxu0
  %v2216 = vadd.f32 0.0, %v2215
  %v2217 = vpop.f32.mrb[0].mxu0
  %v2218 = vadd.f32 0.0, %v2217
  %2219 = vmatprep.mubr.bf16.mxu0 0
  %2220 = vmatmul.mubr.bf16.gmra.mrb[0].mxu0 %v2122
  %v2221 = vpop.f32.mrb[0].mxu0
  %v2222 = vadd.f32 0.0, %v2221
  %v2223 = vpop.f32.mrb[0].mxu0
  %v2224 = vadd.f32 0.0, %v2223
  %v2225 = vpop.f32.mrb[0].mxu0
  %v2226 = vadd.f32 0.0, %v2225
  %v2227 = vpop.f32.mrb[0].mxu0
  %v2228 = vadd.f32 0.0, %v2227
  %2229 = vdwg.mxu0
  %2230 = vmatprep.subr.bf16.mxu0 %v1839
  %2231 = vmatpush1.bf16.msra.mxu0 %v1838
  %2232 = vmatprep.subr.bf16.mxu0 0
  %2233 = vmatpush1.bf16.msra.mxu0 0
  %2234 = vmatprep.subr.bf16.mxu0 0
  %2235 = vmatpush1.bf16.msra.mxu0 0
  %2236 = vmatprep.subr.bf16.mxu0 0
  %2237 = vmatpush1.bf16.msra.mxu0 0
  %2238 = vmatprep.subr.bf16.mxu0 0
  %2239 = vmatpush1.bf16.msra.mxu0 0
  %2240 = vmatprep.subr.bf16.mxu0 0
  %2241 = vmatpush1.bf16.msra.mxu0 0
  %2242 = vmatprep.subr.bf16.mxu0 0
  %2243 = vmatpush1.bf16.msra.mxu0 0
  %2244 = vmatprep.subr.bf16.mxu0 0
  %2245 = vmatpush1.bf16.msra.mxu0 0
  %2246 = vmatprep.subr.bf16.mxu0 0
  %2247 = vmatpush1.bf16.msra.mxu0 0
  %2248 = vmatprep.subr.bf16.mxu0 0
  %2249 = vmatpush1.bf16.msra.mxu0 0
  %2250 = vmatprep.subr.bf16.mxu0 0
  %2251 = vmatpush1.bf16.msra.mxu0 0
  %2252 = vmatprep.subr.bf16.mxu0 0
  %2253 = vmatpush1.bf16.msra.mxu0 0
  %2254 = vmatprep.subr.bf16.mxu0 0
  %2255 = vmatpush1.bf16.msra.mxu0 0
  %2256 = vmatprep.subr.bf16.mxu0 0
  %2257 = vmatpush1.bf16.msra.mxu0 0
  %2258 = vmatprep.subr.bf16.mxu0 0
  %2259 = vmatpush1.bf16.msra.mxu0 0
  %2260 = vmatprep.subr.bf16.mxu0 0
  %2261 = vmatpush1.bf16.msra.mxu0 0
  %2262 = vmatprep.mubr.bf16.mxu0 0
  %2263 = vmatmul.mubr.bf16.gmra.mrb[0].mxu0 %v2119
  %v2264 = vpop.f32.mrb[0].mxu0
  %v2265 = vadd.f32 0.0, %v2264
  %v2266 = vpop.f32.mrb[0].mxu0
  %v2267 = vadd.f32 0.0, %v2266
  %v2268 = vpop.f32.mrb[0].mxu0
  %v2269 = vadd.f32 0.0, %v2268
  %v2270 = vpop.f32.mrb[0].mxu0
  %v2271 = vadd.f32 0.0, %v2270
  %2272 = vmatprep.mubr.bf16.mxu0 0
  %2273 = vmatmul.mubr.bf16.gmra.mrb[0].mxu0 %v2122
  %v2274 = vpop.f32.mrb[0].mxu0
  %v2275 = vadd.f32 0.0, %v2274
  %v2276 = vpop.f32.mrb[0].mxu0
  %v2277 = vadd.f32 0.0, %v2276
  %v2278 = vpop.f32.mrb[0].mxu0
  %v2279 = vadd.f32 0.0, %v2278
  %v2280 = vpop.f32.mrb[0].mxu0
  %v2281 = vadd.f32 0.0, %v2280
  %2282 = vdwg.mxu0
  %2283 = vmatprep.subr.bf16.mxu0 0
  %2284 = vmatpush1.bf16.msra.mxu0 %v1840
  %2285 = vmatprep.subr.bf16.mxu0 0
  %2286 = vmatpush1.bf16.msra.mxu0 0
  %2287 = vmatprep.subr.bf16.mxu0 0
  %2288 = vmatpush1.bf16.msra.mxu0 0
  %2289 = vmatprep.subr.bf16.mxu0 0
  %2290 = vmatpush1.bf16.msra.mxu0 0
  %2291 = vmatprep.subr.bf16.mxu0 0
  %2292 = vmatpush1.bf16.msra.mxu0 0
  %2293 = vmatprep.subr.bf16.mxu0 0
  %2294 = vmatpush1.bf16.msra.mxu0 0
  %2295 = vmatprep.subr.bf16.mxu0 0
  %2296 = vmatpush1.bf16.msra.mxu0 0
  %2297 = vmatprep.subr.bf16.mxu0 0
  %2298 = vmatpush1.bf16.msra.mxu0 0
  %2299 = vmatprep.subr.bf16.mxu0 0
  %2300 = vmatpush1.bf16.msra.mxu0 0
  %2301 = vmatprep.subr.bf16.mxu0 0
  %2302 = vmatpush1.bf16.msra.mxu0 0
  %2303 = vmatprep.subr.bf16.mxu0 0
  %2304 = vmatpush1.bf16.msra.mxu0 0
  %2305 = vmatprep.subr.bf16.mxu0 0
  %2306 = vmatpush1.bf16.msra.mxu0 0
  %2307 = vmatprep.subr.bf16.mxu0 0
  %2308 = vmatpush1.bf16.msra.mxu0 0
  %2309 = vmatprep.subr.bf16.mxu0 0
  %2310 = vmatpush1.bf16.msra.mxu0 0
  %2311 = vmatprep.subr.bf16.mxu0 0
  %2312 = vmatpush1.bf16.msra.mxu0 0
  %2313 = vmatprep.subr.bf16.mxu0 0
  %2314 = vmatpush1.bf16.msra.mxu0 0
  %2315 = vmatprep.mubr.bf16.mxu0 0
  %2316 = vmatmul.mubr.bf16.gmra.mrb[0].mxu0 %v2119
  %v2317 = vpop.f32.mrb[0].mxu0
  %v2318 = vadd.f32 0.0, %v2317
  %v2319 = vpop.f32.mrb[0].mxu0
  %v2320 = vpop.f32.mrb[0].mxu0
  %v2321 = vadd.f32 0.0, %v2320
  %v2322 = vpop.f32.mrb[0].mxu0
  %2323 = vmatprep.mubr.bf16.mxu0 0
  %2324 = vmatmul.mubr.bf16.gmra.mrb[0].mxu0 %v2122
  %v2325 = vpop.f32.mrb[0].mxu0
  %v2326 = vadd.f32 0.0, %v2325
  %v2327 = vpop.f32.mrb[0].mxu0
  %v2328 = vpop.f32.mrb[0].mxu0
  %v2329 = vadd.f32 0.0, %v2328
  %v2330 = vpop.f32.mrb[0].mxu0
  %2331 = vdwg.mxu0
  %v2332 = vmul.f32 %v2159, %v1785
  %v2333 = vmul.f32 %v2161, %v1786
  %v2334 = vmul.f32 %v2212, %v1787
  %v2335 = vmul.f32 %v2214, %v1788
  %v2336 = vmul.f32 %v2265, %v1789
  %v2337 = vmul.f32 %v2267, %v1790
  %v2338 = vmul.f32 %v2318, %v1791
  %v2339 = vmul.f32 %v2163, %v1792
  %v2340 = vmul.f32 %v2165, %v1793
  %v2341 = vmul.f32 %v2216, %v1794
  %v2342 = vmul.f32 %v2218, %v1795
  %v2343 = vmul.f32 %v2269, %v1796
  %v2344 = vmul.f32 %v2271, %v1797
  %v2345 = vmul.f32 %v2321, %v1798
  %v2346 = vadd.f32 %v2332, %v2339
  %v2347 = vadd.f32 %v2333, %v2340
  %v2348 = vadd.f32 %v2334, %v2341
  %v2349 = vadd.f32 %v2335, %v2342
  %v2350 = vadd.f32 %v2336, %v2343
  %v2351 = vadd.f32 %v2337, %v2344
  %v2352 = vadd.f32 %v2338, %v2345
  %v2353 = vmul.f32 %v2169, %v1799
  %v2354 = vmul.f32 %v2171, %v1800
  %v2355 = vmul.f32 %v2222, %v1801
  %v2356 = vmul.f32 %v2224, %v1802
  %v2357 = vmul.f32 %v2275, %v1803
  %v2358 = vmul.f32 %v2277, %v1804
  %v2359 = vmul.f32 %v2326, %v1805
  %v2360 = vadd.f32 %v2346, %v2353
  %v2361 = vadd.f32 %v2347, %v2354
  %v2362 = vadd.f32 %v2348, %v2355
  %v2363 = vadd.f32 %v2349, %v2356
  %v2364 = vadd.f32 %v2350, %v2357
  %v2365 = vadd.f32 %v2351, %v2358
  %v2366 = vadd.f32 %v2352, %v2359
  %v2367 = vadd.f32 %v2360, %v2173
  %v2368 = vadd.f32 %v2361, %v2175
  %v2369 = vadd.f32 %v2362, %v2226
  %v2370 = vadd.f32 %v2363, %v2228
  %v2371 = vadd.f32 %v2364, %v2279
  %v2372 = vadd.f32 %v2365, %v2281
  %v2373 = vadd.f32 %v2366, %v2329
  %2374 = vst [vmem:[%s4 + $0x38] sm:$0xff] %v2367
  %2375 = vst [vmem:[%s4 + $0x40] sm:$0xff] %v2368
  %2376 = vst [vmem:[%s4 + $0x48] sm:$0xff] %v2369
  %2377 = vst [vmem:[%s4 + $0x50] sm:$0xff] %v2370
  %2378 = vst [vmem:[%s4 + $0x58] sm:$0xff] %v2371
  %2379 = vst [vmem:[%s4 + $0x60] sm:$0xff] %v2372
  %2380 = vst [vmem:[%s4 + $0x68] sm:$0xff] %v2373
  %v2381 = vld [vmem:[%s2 + $0x40] sm:$0xff]
  %v2382 = vld [vmem:[%s2 + $0x48] sm:$0xff]
  %v2383 = vld [vmem:[%s2 + $0x50] sm:$0xff]
  %v2384 = vld [vmem:[%s2 + $0x58] sm:$0xff]
  %v2385 = vpack.c.bf16 %v2382, %v2381
  %v2386 = vpack.c.bf16 %v2384, %v2383
  %v2388 = vsel %vm1848, %v2385, 0
  %v2391 = vsel %vm1848, %v2386, 0
  %2393 = vmatprep.subr.bf16.mxu0 %v1835
  %2394 = vmatpush1.bf16.msra.mxu0 %v1834
  %2395 = vmatprep.subr.bf16.mxu0 0
  %2396 = vmatpush1.bf16.msra.mxu0 0
  %2397 = vmatprep.subr.bf16.mxu0 0
  %2398 = vmatpush1.bf16.msra.mxu0 0
  %2399 = vmatprep.subr.bf16.mxu0 0
  %2400 = vmatpush1.bf16.msra.mxu0 0
  %2401 = vmatprep.subr.bf16.mxu0 0
  %2402 = vmatpush1.bf16.msra.mxu0 0
  %2403 = vmatprep.subr.bf16.mxu0 0
  %2404 = vmatpush1.bf16.msra.mxu0 0
  %2405 = vmatprep.subr.bf16.mxu0 0
  %2406 = vmatpush1.bf16.msra.mxu0 0
  %2407 = vmatprep.subr.bf16.mxu0 0
  %2408 = vmatpush1.bf16.msra.mxu0 0
  %2409 = vmatprep.subr.bf16.mxu0 0
  %2410 = vmatpush1.bf16.msra.mxu0 0
  %2411 = vmatprep.subr.bf16.mxu0 0
  %2412 = vmatpush1.bf16.msra.mxu0 0
  %2413 = vmatprep.subr.bf16.mxu0 0
  %2414 = vmatpush1.bf16.msra.mxu0 0
  %2415 = vmatprep.subr.bf16.mxu0 0
  %2416 = vmatpush1.bf16.msra.mxu0 0
  %2417 = vmatprep.subr.bf16.mxu0 0
  %2418 = vmatpush1.bf16.msra.mxu0 0
  %2419 = vmatprep.subr.bf16.mxu0 0
  %2420 = vmatpush1.bf16.msra.mxu0 0
  %2421 = vmatprep.subr.bf16.mxu0 0
  %2422 = vmatpush1.bf16.msra.mxu0 0
  %2423 = vmatprep.subr.bf16.mxu0 0
  %2424 = vmatpush1.bf16.msra.mxu0 0
  %2425 = vmatprep.mubr.bf16.mxu0 0
  %2426 = vmatmul.mubr.bf16.gmra.mrb[0].mxu0 %v2388
  %v2427 = vpop.f32.mrb[0].mxu0
  %v2428 = vadd.f32 0.0, %v2427
  %v2429 = vpop.f32.mrb[0].mxu0
  %v2430 = vadd.f32 0.0, %v2429
  %v2431 = vpop.f32.mrb[0].mxu0
  %v2432 = vadd.f32 0.0, %v2431
  %v2433 = vpop.f32.mrb[0].mxu0
  %v2434 = vadd.f32 0.0, %v2433
  %2435 = vmatprep.mubr.bf16.mxu0 0
  %2436 = vmatmul.mubr.bf16.gmra.mrb[0].mxu0 %v2391
  %v2437 = vpop.f32.mrb[0].mxu0
  %v2438 = vadd.f32 0.0, %v2437
  %v2439 = vpop.f32.mrb[0].mxu0
  %v2440 = vadd.f32 0.0, %v2439
  %v2441 = vpop.f32.mrb[0].mxu0
  %v2442 = vadd.f32 0.0, %v2441
  %v2443 = vpop.f32.mrb[0].mxu0
  %v2444 = vadd.f32 0.0, %v2443
  %2445 = vdwg.mxu0
  %2446 = vmatprep.subr.bf16.mxu0 %v1837
  %2447 = vmatpush1.bf16.msra.mxu0 %v1836
  %2448 = vmatprep.subr.bf16.mxu0 0
  %2449 = vmatpush1.bf16.msra.mxu0 0
  %2450 = vmatprep.subr.bf16.mxu0 0
  %2451 = vmatpush1.bf16.msra.mxu0 0
  %2452 = vmatprep.subr.bf16.mxu0 0
  %2453 = vmatpush1.bf16.msra.mxu0 0
  %2454 = vmatprep.subr.bf16.mxu0 0
  %2455 = vmatpush1.bf16.msra.mxu0 0
  %2456 = vmatprep.subr.bf16.mxu0 0
  %2457 = vmatpush1.bf16.msra.mxu0 0
  %2458 = vmatprep.subr.bf16.mxu0 0
  %2459 = vmatpush1.bf16.msra.mxu0 0
  %2460 = vmatprep.subr.bf16.mxu0 0
  %2461 = vmatpush1.bf16.msra.mxu0 0
  %2462 = vmatprep.subr.bf16.mxu0 0
  %2463 = vmatpush1.bf16.msra.mxu0 0
  %2464 = vmatprep.subr.bf16.mxu0 0
  %2465 = vmatpush1.bf16.msra.mxu0 0
  %2466 = vmatprep.subr.bf16.mxu0 0
  %2467 = vmatpush1.bf16.msra.mxu0 0
  %2468 = vmatprep.subr.bf16.mxu0 0
  %2469 = vmatpush1.bf16.msra.mxu0 0
  %2470 = vmatprep.subr.bf16.mxu0 0
  %2471 = vmatpush1.bf16.msra.mxu0 0
  %2472 = vmatprep.subr.bf16.mxu0 0
  %2473 = vmatpush1.bf16.msra.mxu0 0
  %2474 = vmatprep.subr.bf16.mxu0 0
  %2475 = vmatpush1.bf16.msra.mxu0 0
  %2476 = vmatprep.subr.bf16.mxu0 0
  %2477 = vmatpush1.bf16.msra.mxu0 0
  %2478 = vmatprep.mubr.bf16.mxu0 0
  %2479 = vmatmul.mubr.bf16.gmra.mrb[0].mxu0 %v2388
  %v2480 = vpop.f32.mrb[0].mxu0
  %v2481 = vadd.f32 0.0, %v2480
  %v2482 = vpop.f32.mrb[0].mxu0
  %v2483 = vadd.f32 0.0, %v2482
  %v2484 = vpop.f32.mrb[0].mxu0
  %v2485 = vadd.f32 0.0, %v2484
  %v2486 = vpop.f32.mrb[0].mxu0
  %v2487 = vadd.f32 0.0, %v2486
  %2488 = vmatprep.mubr.bf16.mxu0 0
  %2489 = vmatmul.mubr.bf16.gmra.mrb[0].mxu0 %v2391
  %v2490 = vpop.f32.mrb[0].mxu0
  %v2491 = vadd.f32 0.0, %v2490
  %v2492 = vpop.f32.mrb[0].mxu0
  %v2493 = vadd.f32 0.0, %v2492
  %v2494 = vpop.f32.mrb[0].mxu0
  %v2495 = vadd.f32 0.0, %v2494
  %v2496 = vpop.f32.mrb[0].mxu0
  %v2497 = vadd.f32 0.0, %v2496
  %2498 = vdwg.mxu0
  %2499 = vmatprep.subr.bf16.mxu0 %v1839
  %2500 = vmatpush1.bf16.msra.mxu0 %v1838
  %2501 = vmatprep.subr.bf16.mxu0 0
  %2502 = vmatpush1.bf16.msra.mxu0 0
  %2503 = vmatprep.subr.bf16.mxu0 0
  %2504 = vmatpush1.bf16.msra.mxu0 0
  %2505 = vmatprep.subr.bf16.mxu0 0
  %2506 = vmatpush1.bf16.msra.mxu0 0
  %2507 = vmatprep.subr.bf16.mxu0 0
  %2508 = vmatpush1.bf16.msra.mxu0 0
  %2509 = vmatprep.subr.bf16.mxu0 0
  %2510 = vmatpush1.bf16.msra.mxu0 0
  %2511 = vmatprep.subr.bf16.mxu0 0
  %2512 = vmatpush1.bf16.msra.mxu0 0
  %2513 = vmatprep.subr.bf16.mxu0 0
  %2514 = vmatpush1.bf16.msra.mxu0 0
  %2515 = vmatprep.subr.bf16.mxu0 0
  %2516 = vmatpush1.bf16.msra.mxu0 0
  %2517 = vmatprep.subr.bf16.mxu0 0
  %2518 = vmatpush1.bf16.msra.mxu0 0
  %2519 = vmatprep.subr.bf16.mxu0 0
  %2520 = vmatpush1.bf16.msra.mxu0 0
  %2521 = vmatprep.subr.bf16.mxu0 0
  %2522 = vmatpush1.bf16.msra.mxu0 0
  %2523 = vmatprep.subr.bf16.mxu0 0
  %2524 = vmatpush1.bf16.msra.mxu0 0
  %2525 = vmatprep.subr.bf16.mxu0 0
  %2526 = vmatpush1.bf16.msra.mxu0 0
  %2527 = vmatprep.subr.bf16.mxu0 0
  %2528 = vmatpush1.bf16.msra.mxu0 0
  %2529 = vmatprep.subr.bf16.mxu0 0
  %2530 = vmatpush1.bf16.msra.mxu0 0
  %2531 = vmatprep.mubr.bf16.mxu0 0
  %2532 = vmatmul.mubr.bf16.gmra.mrb[0].mxu0 %v2388
  %v2533 = vpop.f32.mrb[0].mxu0
  %v2534 = vadd.f32 0.0, %v2533
  %v2535 = vpop.f32.mrb[0].mxu0
  %v2536 = vadd.f32 0.0, %v2535
  %v2537 = vpop.f32.mrb[0].mxu0
  %v2538 = vadd.f32 0.0, %v2537
  %v2539 = vpop.f32.mrb[0].mxu0
  %v2540 = vadd.f32 0.0, %v2539
  %2541 = vmatprep.mubr.bf16.mxu0 0
  %2542 = vmatmul.mubr.bf16.gmra.mrb[0].mxu0 %v2391
  %v2543 = vpop.f32.mrb[0].mxu0
  %v2544 = vadd.f32 0.0, %v2543
  %v2545 = vpop.f32.mrb[0].mxu0
  %v2546 = vadd.f32 0.0, %v2545
  %v2547 = vpop.f32.mrb[0].mxu0
  %v2548 = vadd.f32 0.0, %v2547
  %v2549 = vpop.f32.mrb[0].mxu0
  %v2550 = vadd.f32 0.0, %v2549
  %2551 = vdwg.mxu0
  %2552 = vmatprep.subr.bf16.mxu0 0
  %2553 = vmatpush1.bf16.msra.mxu0 %v1840
  %2554 = vmatprep.subr.bf16.mxu0 0
  %2555 = vmatpush1.bf16.msra.mxu0 0
  %2556 = vmatprep.subr.bf16.mxu0 0
  %2557 = vmatpush1.bf16.msra.mxu0 0
  %2558 = vmatprep.subr.bf16.mxu0 0
  %2559 = vmatpush1.bf16.msra.mxu0 0
  %2560 = vmatprep.subr.bf16.mxu0 0
  %2561 = vmatpush1.bf16.msra.mxu0 0
  %2562 = vmatprep.subr.bf16.mxu0 0
  %2563 = vmatpush1.bf16.msra.mxu0 0
  %2564 = vmatprep.subr.bf16.mxu0 0
  %2565 = vmatpush1.bf16.msra.mxu0 0
  %2566 = vmatprep.subr.bf16.mxu0 0
  %2567 = vmatpush1.bf16.msra.mxu0 0
  %2568 = vmatprep.subr.bf16.mxu0 0
  %2569 = vmatpush1.bf16.msra.mxu0 0
  %2570 = vmatprep.subr.bf16.mxu0 0
  %2571 = vmatpush1.bf16.msra.mxu0 0
  %2572 = vmatprep.subr.bf16.mxu0 0
  %2573 = vmatpush1.bf16.msra.mxu0 0
  %2574 = vmatprep.subr.bf16.mxu0 0
  %2575 = vmatpush1.bf16.msra.mxu0 0
  %2576 = vmatprep.subr.bf16.mxu0 0
  %2577 = vmatpush1.bf16.msra.mxu0 0
  %2578 = vmatprep.subr.bf16.mxu0 0
  %2579 = vmatpush1.bf16.msra.mxu0 0
  %2580 = vmatprep.subr.bf16.mxu0 0
  %2581 = vmatpush1.bf16.msra.mxu0 0
  %2582 = vmatprep.subr.bf16.mxu0 0
  %2583 = vmatpush1.bf16.msra.mxu0 0
  %2584 = vmatprep.mubr.bf16.mxu0 0
  %2585 = vmatmul.mubr.bf16.gmra.mrb[0].mxu0 %v2388
  %v2586 = vpop.f32.mrb[0].mxu0
  %v2587 = vadd.f32 0.0, %v2586
  %v2588 = vpop.f32.mrb[0].mxu0
  %v2589 = vpop.f32.mrb[0].mxu0
  %v2590 = vadd.f32 0.0, %v2589
  %v2591 = vpop.f32.mrb[0].mxu0
  %2592 = vmatprep.mubr.bf16.mxu0 0
  %2593 = vmatmul.mubr.bf16.gmra.mrb[0].mxu0 %v2391
  %v2594 = vpop.f32.mrb[0].mxu0
  %v2595 = vadd.f32 0.0, %v2594
  %v2596 = vpop.f32.mrb[0].mxu0
  %v2597 = vpop.f32.mrb[0].mxu0
  %v2598 = vadd.f32 0.0, %v2597
  %v2599 = vpop.f32.mrb[0].mxu0
  %2600 = vdwg.mxu0
  %v2601 = vmul.f32 %v2428, %v1785
  %v2602 = vmul.f32 %v2430, %v1786
  %v2603 = vmul.f32 %v2481, %v1787
  %v2604 = vmul.f32 %v2483, %v1788
  %v2605 = vmul.f32 %v2534, %v1789
  %v2606 = vmul.f32 %v2536, %v1790
  %v2607 = vmul.f32 %v2587, %v1791
  %v2608 = vmul.f32 %v2432, %v1792
  %v2609 = vmul.f32 %v2434, %v1793
  %v2610 = vmul.f32 %v2485, %v1794
  %v2611 = vmul.f32 %v2487, %v1795
  %v2612 = vmul.f32 %v2538, %v1796
  %v2613 = vmul.f32 %v2540, %v1797
  %v2614 = vmul.f32 %v2590, %v1798
  %v2615 = vadd.f32 %v2601, %v2608
  %v2616 = vadd.f32 %v2602, %v2609
  %v2617 = vadd.f32 %v2603, %v2610
  %v2618 = vadd.f32 %v2604, %v2611
  %v2619 = vadd.f32 %v2605, %v2612
  %v2620 = vadd.f32 %v2606, %v2613
  %v2621 = vadd.f32 %v2607, %v2614
  %v2622 = vmul.f32 %v2438, %v1799
  %v2623 = vmul.f32 %v2440, %v1800
  %v2624 = vmul.f32 %v2491, %v1801
  %v2625 = vmul.f32 %v2493, %v1802
  %v2626 = vmul.f32 %v2544, %v1803
  %v2627 = vmul.f32 %v2546, %v1804
  %v2628 = vmul.f32 %v2595, %v1805
  %v2629 = vadd.f32 %v2615, %v2622
  %v2630 = vadd.f32 %v2616, %v2623
  %v2631 = vadd.f32 %v2617, %v2624
  %v2632 = vadd.f32 %v2618, %v2625
  %v2633 = vadd.f32 %v2619, %v2626
  %v2634 = vadd.f32 %v2620, %v2627
  %v2635 = vadd.f32 %v2621, %v2628
  %v2636 = vadd.f32 %v2629, %v2442
  %v2637 = vadd.f32 %v2630, %v2444
  %v2638 = vadd.f32 %v2631, %v2495
  %v2639 = vadd.f32 %v2632, %v2497
  %v2640 = vadd.f32 %v2633, %v2548
  %v2641 = vadd.f32 %v2634, %v2550
  %v2642 = vadd.f32 %v2635, %v2598
  %2643 = vst [vmem:[%s4 + $0x70] sm:$0xff] %v2636
  %2644 = vst [vmem:[%s4 + $0x78] sm:$0xff] %v2637
  %2645 = vst [vmem:[%s4 + $0x80] sm:$0xff] %v2638
  %2646 = vst [vmem:[%s4 + $0x88] sm:$0xff] %v2639
  %2647 = vst [vmem:[%s4 + $0x90] sm:$0xff] %v2640
  %2648 = vst [vmem:[%s4 + $0x98] sm:$0xff] %v2641
  %2649 = vst [vmem:[%s4 + $0xa0] sm:$0xff] %v2642
  // Predicated region
  $region18: #{mano_forward.1} parent=0 // pred_check
    _
  $region19: #{mano_forward.1} parent=0 // pred_check_branch
    %2651 = sbr.rel (0) target = $region21
  $region20: #{mano_forward.1} parent=0 // pred_region
    _
  $region21: #{mano_forward.1} parent=0 // pred_fallthru
    _
  // Predicated region
  $region22: #{mano_forward.1} parent=0 // pred_check
    _
  $region23: #{mano_forward.1} parent=0 // pred_check_branch
    %2653 = sbr.rel (0) target = $region25
  $region24: #{mano_forward.1} parent=0 // pred_region
    _
  $region25: #{mano_forward.1} parent=0 // pred_fallthru
    _

</llo_original>
